<compile_context>
chip_gen: v5e
topology: v5e:2x2
jax: 0.10.0
libtpu: 0.0.40
codegen_flags: <defaults>
</compile_context>

<pallas_src>
import functools

import jax
import jax.numpy as jnp
import numpy as np
from jax.experimental import pallas as pl
from jax.experimental.pallas import tpu as pltpu

EPS = 1e-5
# bf16 MXU operands (full rate on v6e/v7x, supported on v5e).  Accumulation and all
# BatchNorm statistics / elementwise math stay in float32.
MXU_DTYPE = jnp.bfloat16
_SUBLANE = 8                       # f32 sublane tile; channels zero-padded to this
VMEM_LIMIT = 32 * 1024 * 1024      # well under v7x's 64 MiB physical VMEM


def _conv_stats_kernel(x_ref, w_ref, conv_ref, sum_ref, sumsq_ref, *,
                       stride, ksize_h, ksize_w, hout, wout):
    """Phase 1 (one image per grid step): conv as a single im2col matmul + partial stats.

    x_ref:     (1, Cin_pad, Hp, Wp)   spatially padded, channel-padded input image
    w_ref:     (Cout, KH*KW*Cin_pad)  weights in MXU dtype, tap-major / channel-minor
    conv_ref:  (1, Cout, Hout*Wout)   f32 conv output, lane-dense flattened NCHW
    sum_ref:   (1, Cout, 1)           per-channel sum over this image
    sumsq_ref: (1, Cout, 1)           per-channel sum of squares over this image
    """
    x = x_ref[0].astype(jnp.float32)                 # (Cin_pad, Hp, Wp)
    cin_pad = x.shape[0]
    hw = hout * wout

    # im2col: (KH*KW*Cin_pad, Hout*Wout) with spatial on lanes.  Each tap contributes
    # a sublane-aligned (Cin_pad, HW) block, so the concatenation is tile-aligned.
    blocks = []
    for i in range(ksize_h):                         # static python loops, unrolled
        for j in range(ksize_w):
            patch = x[:,
                      i: i + (hout - 1) * stride + 1: stride,
                      j: j + (wout - 1) * stride + 1: stride]     # (Cin_pad, Hout, Wout)
            blocks.append(patch.reshape(cin_pad, hw))
    im2col = jnp.concatenate(blocks, axis=0)         # (KH*KW*Cin_pad, HW)

    # Single MXU contraction: bf16 operands, f32 accumulator.
    acc = jnp.dot(w_ref[...], im2col.astype(MXU_DTYPE),
                  preferred_element_type=jnp.float32)             # (Cout, HW)

    conv_ref[0] = acc.astype(conv_ref.dtype)

    # Per-image partial BatchNorm statistics in f32 (lane reductions -> XLU slot).
    sum_ref[0] = jnp.sum(acc, axis=1, keepdims=True)              # (Cout, 1)
    sumsq_ref[0] = jnp.sum(acc * acc, axis=1, keepdims=True)      # (Cout, 1)


def _bn_apply_kernel(conv_ref, scale_ref, shift_ref, o_ref):
    """Phase 2 (one image per grid step): y = conv * scale + shift, lane-dense."""
    o_ref[0] = (conv_ref[0] * scale_ref[...] + shift_ref[...]).astype(o_ref.dtype)


def conv_block_forward(x_nchw, weight_oihw, gamma, beta, *, stride, padding):
    """ConvBlock forward.  x_nchw: (N, Cin, H, W); weight_oihw: (Cout, Cin, KH, KW)."""
    N, Cin, H, W = x_nchw.shape
    Cout, _, KH, KW = weight_oihw.shape
    Hp, Wp = H + 2 * padding, W + 2 * padding
    Hout = (Hp - KH) // stride + 1
    Wout = (Wp - KW) // stride + 1
    HWo = Hout * Wout
    cin_pad = ((Cin + _SUBLANE - 1) // _SUBLANE) * _SUBLANE

    # TODO(synk): groups > 1 (grouped conv) is not implemented in the kernel.
    # TODO(synk): for large spatial sizes, add a second grid axis over Hout row-blocks
    #             (overlapping input windows via pl.Element) instead of one image/step.
    # TODO(synk): halo/zero-padding could be done in-kernel to drop this jnp.pad pass.

    # One cheap pad pass (spatial halo + channel pad to the sublane tile); NO
    # activation transposes: the kernels consume NCHW and emit flattened NCHW.
    x_pad = jnp.pad(x_nchw, ((0, 0), (0, cin_pad - Cin),
                             (padding, padding), (padding, padding)))

    # Weight as (Cout, KH*KW*Cin_pad): taps (kh, kw) outer, channels inner, matching
    # the kernel's im2col row order; zero-pad channels; pre-cast to the MXU dtype once.
    w4d = jnp.transpose(weight_oihw, (0, 2, 3, 1))                # (Cout, KH, KW, Cin)
    w4d = jnp.pad(w4d, ((0, 0), (0, 0), (0, 0), (0, cin_pad - Cin)))
    w2d = w4d.reshape(Cout, KH * KW * cin_pad).astype(MXU_DTYPE)

    conv_flops = 2 * N * HWo * KH * KW * Cin * Cout
    phase1_bytes = (x_pad.size * x_pad.dtype.itemsize
                    + w2d.size * w2d.dtype.itemsize
                    + N * Cout * HWo * 4 + 2 * N * Cout * 4)

    kernel1 = functools.partial(_conv_stats_kernel, stride=stride,
                                ksize_h=KH, ksize_w=KW, hout=Hout, wout=Wout)

    conv_out, sums, sumsqs = pl.pallas_call(
        kernel1,
        out_shape=(jax.ShapeDtypeStruct((N, Cout, HWo), jnp.float32),
                   jax.ShapeDtypeStruct((N, Cout, 1), jnp.float32),
                   jax.ShapeDtypeStruct((N, Cout, 1), jnp.float32)),
        grid=(N,),
        in_specs=[
            pl.BlockSpec((1, cin_pad, Hp, Wp), lambda n: (n, 0, 0, 0)),
            pl.BlockSpec((Cout, KH * KW * cin_pad), lambda n: (0, 0)),
        ],
        out_specs=(
            pl.BlockSpec((1, Cout, HWo), lambda n: (n, 0, 0)),
            pl.BlockSpec((1, Cout, 1), lambda n: (n, 0, 0)),
            pl.BlockSpec((1, Cout, 1), lambda n: (n, 0, 0)),
        ),
        compiler_params=pltpu.CompilerParams(
            dimension_semantics=("parallel",),
            vmem_limit_bytes=VMEM_LIMIT),
        cost_estimate=pl.CostEstimate(flops=conv_flops, transcendentals=0,
                                      bytes_accessed=phase1_bytes),
    )(x_pad, w2d)

    # Tiny (Cout,)-sized epilogue: fold partial sums into the BN affine (f32).
    # Note: E[x^2]-E[x]^2 is slightly less stable than two-pass variance; fine in f32
    # for conv+BN magnitudes, clamped at 0 for safety.
    count = jnp.float32(N * HWo)
    ch_sum = jnp.sum(sums, axis=0)[:, 0]                          # (Cout,)
    ch_sumsq = jnp.sum(sumsqs, axis=0)[:, 0]                      # (Cout,)
    mean = ch_sum / count
    var = jnp.maximum(ch_sumsq / count - mean * mean, 0.0)        # biased variance
    inv_std = jax.lax.rsqrt(var + EPS)
    scale = gamma.astype(jnp.float32) * inv_std                   # (Cout,)
    shift = beta.astype(jnp.float32) - mean * scale               # (Cout,)
    scale2 = scale.reshape(Cout, 1)
    shift2 = shift.reshape(Cout, 1)

    phase2_bytes = (N * Cout * HWo * 4 + 2 * Cout * 4
                    + N * Cout * HWo * x_nchw.dtype.itemsize)

    out_flat = pl.pallas_call(
        _bn_apply_kernel,
        out_shape=jax.ShapeDtypeStruct((N, Cout, HWo), x_nchw.dtype),
        grid=(N,),
        in_specs=[
            pl.BlockSpec((1, Cout, HWo), lambda n: (n, 0, 0)),
            pl.BlockSpec((Cout, 1), lambda n: (0, 0)),
            pl.BlockSpec((Cout, 1), lambda n: (0, 0)),
        ],
        out_specs=pl.BlockSpec((1, Cout, HWo), lambda n: (n, 0, 0)),
        compiler_params=pltpu.CompilerParams(
            dimension_semantics=("parallel",),
            vmem_limit_bytes=VMEM_LIMIT),
        cost_estimate=pl.CostEstimate(flops=2 * N * Cout * HWo, transcendentals=0,
                                      bytes_accessed=phase2_bytes),
    )(conv_out, scale2, shift2)

    # Flattened NCHW -> NCHW: contiguity-preserving reshape, no data movement.
    return out_flat.reshape(N, Cout, Hout, Wout)


def _reference(x_nchw, weight_oihw, gamma, beta, *, stride, padding):
    # Pure-JAX f32 reference: conv (NCHW/OIHW) + training-mode batchnorm.
    conv = jax.lax.conv_general_dilated(
        x_nchw.astype(jnp.float32), weight_oihw.astype(jnp.float32),
        window_strides=(stride, stride),
        padding=[(padding, padding), (padding, padding)],
        dimension_numbers=("NCHW", "OIHW", "NCHW"))
    mean = jnp.mean(conv, axis=(0, 2, 3), keepdims=True)
    var = jnp.mean((conv - mean) ** 2, axis=(0, 2, 3), keepdims=True)
    y = (conv - mean) * jax.lax.rsqrt(var + EPS)
    return y * gamma.reshape(1, -1, 1, 1) + beta.reshape(1, -1, 1, 1)


if __name__ == "__main__":
    # ConvBlock(in_channels=4, out_channels=8, kernel_size=3, stride=1, padding=1,
    #           groups=1, bias=False)
    N, Cin, H, W = 2, 4, 16, 16
    Cout, KH, KW = 8, 3, 3
    stride, padding = 1, 1

    key = jax.random.PRNGKey(0)
    kx, kw = jax.random.split(key)
    x = jax.random.normal(kx, (N, Cin, H, W), dtype=jnp.float32)
    # Deterministic conv weight init (kaiming-uniform-like scale), OIHW.
    fan_in = Cin * KH * KW
    bound = 1.0 / np.sqrt(fan_in)
    weight = jax.random.uniform(kw, (Cout, Cin, KH, KW),
                                minval=-bound, maxval=bound, dtype=jnp.float32)
    # Fresh BatchNorm2d params.
    gamma = jnp.ones((Cout,), jnp.float32)
    beta = jnp.zeros((Cout,), jnp.float32)

    out = conv_block_forward(x, weight, gamma, beta, stride=stride, padding=padding)
    out = jax.block_until_ready(out)

    ref = _reference(x, weight, gamma, beta, stride=stride, padding=padding)
    # Tolerance reflects bf16 MXU operands (per perf guidance for v6e/v7x); the
    # f32-accumulated / f32-normalized result stays well inside 5e-2 of the f32 ref.
    np.testing.assert_allclose(np.asarray(out), np.asarray(ref), atol=5e-2, rtol=5e-2)

    print("KERNEL_OK")
</pallas_src>

<mosaic_0001>
module attributes {stable_mosaic.version = 11 : i64} {
  func.func @_conv_stats_kernel(%arg0: i32, %arg1: memref<1x8x18x18xf32, #tpu.memory_space<vmem>>, %arg2: memref<8x72xbf16, #tpu.memory_space<vmem>>, %arg3: memref<1x8x256xf32, #tpu.memory_space<vmem>>, %arg4: memref<1x8x1xf32, #tpu.memory_space<vmem>>, %arg5: memref<1x8x1xf32, #tpu.memory_space<vmem>>) attributes {dimension_semantics = [#tpu.dimension_semantics<parallel>], iteration_bounds = array<i64: 2>, scalar_prefetch = 0 : i64, scratch_operands = 0 : i64, tpu.core_type = #tpu.core_type<tc>, window_params = [{transform_indices = @transform_0, window_bounds = array<i64: 1, 8, 18, 18>}, {pipeline_mode = #tpu.pipeline_mode<synchronous>, transform_indices = @transform_1, window_bounds = array<i64: 8, 72>}, {transform_indices = @transform_2, window_bounds = array<i64: 1, 8, 256>}, {transform_indices = @transform_3, window_bounds = array<i64: 1, 8, 1>}, {transform_indices = @transform_4, window_bounds = array<i64: 1, 8, 1>}]} {
    %c0 = arith.constant 0 : index
    %c0_0 = arith.constant 0 : index
    %c0_1 = arith.constant 0 : index
    %c0_2 = arith.constant 0 : index
    %0 = vector.load %arg1[%c0, %c0_0, %c0_1, %c0_2] : memref<1x8x18x18xf32, #tpu.memory_space<vmem>>, vector<1x8x18x18xf32>
    %1 = vector.shape_cast %0 : vector<1x8x18x18xf32> to vector<8x18x18xf32>
    %2 = vector.extract_strided_slice %1 {offsets = [0, 0, 0], sizes = [8, 16, 16], strides = [1, 1, 1]} : vector<8x18x18xf32> to vector<8x16x16xf32>
    %3 = vector.shape_cast %2 : vector<8x16x16xf32> to vector<8x256xf32>
    %4 = vector.extract_strided_slice %1 {offsets = [0, 0, 1], sizes = [8, 16, 16], strides = [1, 1, 1]} : vector<8x18x18xf32> to vector<8x16x16xf32>
    %5 = vector.shape_cast %4 : vector<8x16x16xf32> to vector<8x256xf32>
    %6 = vector.extract_strided_slice %1 {offsets = [0, 0, 2], sizes = [8, 16, 16], strides = [1, 1, 1]} : vector<8x18x18xf32> to vector<8x16x16xf32>
    %7 = vector.shape_cast %6 : vector<8x16x16xf32> to vector<8x256xf32>
    %8 = vector.extract_strided_slice %1 {offsets = [0, 1, 0], sizes = [8, 16, 16], strides = [1, 1, 1]} : vector<8x18x18xf32> to vector<8x16x16xf32>
    %9 = vector.shape_cast %8 : vector<8x16x16xf32> to vector<8x256xf32>
    %10 = vector.extract_strided_slice %1 {offsets = [0, 1, 1], sizes = [8, 16, 16], strides = [1, 1, 1]} : vector<8x18x18xf32> to vector<8x16x16xf32>
    %11 = vector.shape_cast %10 : vector<8x16x16xf32> to vector<8x256xf32>
    %12 = vector.extract_strided_slice %1 {offsets = [0, 1, 2], sizes = [8, 16, 16], strides = [1, 1, 1]} : vector<8x18x18xf32> to vector<8x16x16xf32>
    %13 = vector.shape_cast %12 : vector<8x16x16xf32> to vector<8x256xf32>
    %14 = vector.extract_strided_slice %1 {offsets = [0, 2, 0], sizes = [8, 16, 16], strides = [1, 1, 1]} : vector<8x18x18xf32> to vector<8x16x16xf32>
    %15 = vector.shape_cast %14 : vector<8x16x16xf32> to vector<8x256xf32>
    %16 = vector.extract_strided_slice %1 {offsets = [0, 2, 1], sizes = [8, 16, 16], strides = [1, 1, 1]} : vector<8x18x18xf32> to vector<8x16x16xf32>
    %17 = vector.shape_cast %16 : vector<8x16x16xf32> to vector<8x256xf32>
    %18 = vector.extract_strided_slice %1 {offsets = [0, 2, 2], sizes = [8, 16, 16], strides = [1, 1, 1]} : vector<8x18x18xf32> to vector<8x16x16xf32>
    %19 = vector.shape_cast %18 : vector<8x16x16xf32> to vector<8x256xf32>
    %20 = tpu.concatenate %3, %5, %7, %9, %11, %13, %15, %17, %19 in 0 : vector<8x256xf32>, vector<8x256xf32>, vector<8x256xf32>, vector<8x256xf32>, vector<8x256xf32>, vector<8x256xf32>, vector<8x256xf32>, vector<8x256xf32>, vector<8x256xf32> -> vector<72x256xf32>
    %c0_3 = arith.constant 0 : index
    %c0_4 = arith.constant 0 : index
    %21 = vector.load %arg2[%c0_3, %c0_4] : memref<8x72xbf16, #tpu.memory_space<vmem>>, vector<8x72xbf16>
    %22 = arith.truncf %20 : vector<72x256xf32> to vector<72x256xbf16>
    %cst = arith.constant dense<0.000000e+00> : vector<8x256xf32>
    %23 = tpu.matmul %21, %22, %cst {dimension_numbers = #tpu.dot_dimension_numbers<[1], [0], [0], [1], [0, 0, 1, 1], [], []>} : vector<8x72xbf16>, vector<72x256xbf16>, vector<8x256xf32> -> vector<8x256xf32>
    %c0_5 = arith.constant 0 : index
    %c0_6 = arith.constant 0 : index
    %c0_7 = arith.constant 0 : index
    %24 = vector.load %arg3[%c0_5, %c0_6, %c0_7] : memref<1x8x256xf32, #tpu.memory_space<vmem>>, vector<1x8x256xf32>
    %25 = vector.shape_cast %24 : vector<1x8x256xf32> to vector<8x256xf32>
    %26 = vector.shape_cast %23 : vector<8x256xf32> to vector<1x8x256xf32>
    tpu.vector_store %arg3[%c0_5, %c0_6, %c0_7], %26 {strides = array<i32>} : memref<1x8x256xf32, #tpu.memory_space<vmem>>, vector<1x8x256xf32>,
    %cst_8 = arith.constant dense<0.000000e+00> : vector<8xf32>
    %27 = vector.multi_reduction <add>, %23, %cst_8 [1] : vector<8x256xf32> to vector<8xf32>
    %28 = vector.shape_cast %27 : vector<8xf32> to vector<8x1xf32>
    %c0_9 = arith.constant 0 : index
    %c0_10 = arith.constant 0 : index
    %c0_11 = arith.constant 0 : index
    %29 = vector.load %arg4[%c0_9, %c0_10, %c0_11] : memref<1x8x1xf32, #tpu.memory_space<vmem>>, vector<1x8x1xf32>
    %30 = vector.shape_cast %29 : vector<1x8x1xf32> to vector<8x1xf32>
    %31 = vector.shape_cast %28 : vector<8x1xf32> to vector<1x8x1xf32>
    tpu.vector_store %arg4[%c0_9, %c0_10, %c0_11], %31 {strides = array<i32>} : memref<1x8x1xf32, #tpu.memory_space<vmem>>, vector<1x8x1xf32>,
    %32 = arith.mulf %23, %23 : vector<8x256xf32>
    %cst_12 = arith.constant dense<0.000000e+00> : vector<8xf32>
    %33 = vector.multi_reduction <add>, %32, %cst_12 [1] : vector<8x256xf32> to vector<8xf32>
    %34 = vector.shape_cast %33 : vector<8xf32> to vector<8x1xf32>
    %c0_13 = arith.constant 0 : index
    %c0_14 = arith.constant 0 : index
    %c0_15 = arith.constant 0 : index
    %35 = vector.load %arg5[%c0_13, %c0_14, %c0_15] : memref<1x8x1xf32, #tpu.memory_space<vmem>>, vector<1x8x1xf32>
    %36 = vector.shape_cast %35 : vector<1x8x1xf32> to vector<8x1xf32>
    %37 = vector.shape_cast %34 : vector<8x1xf32> to vector<1x8x1xf32>
    tpu.vector_store %arg5[%c0_13, %c0_14, %c0_15], %37 {strides = array<i32>} : memref<1x8x1xf32, #tpu.memory_space<vmem>>, vector<1x8x1xf32>,
    return
  }
  func.func @transform_0(%arg0: i32) -> (i32, i32, i32, i32) {
    %c0_i32 = arith.constant 0 : i32
    %c0_i32_0 = arith.constant 0 : i32
    %c0_i32_1 = arith.constant 0 : i32
    %c0_i32_2 = arith.constant 0 : i32
    return %arg0, %c0_i32, %c0_i32_0, %c0_i32_1 : i32, i32, i32, i32
  }
  func.func @transform_1(%arg0: i32) -> (i32, i32) {
    %c0_i32 = arith.constant 0 : i32
    %c0_i32_0 = arith.constant 0 : i32
    %c0_i32_1 = arith.constant 0 : i32
    return %c0_i32, %c0_i32_0 : i32, i32
  }
  func.func @transform_2(%arg0: i32) -> (i32, i32, i32) {
    %c0_i32 = arith.constant 0 : i32
    %c0_i32_0 = arith.constant 0 : i32
    %c0_i32_1 = arith.constant 0 : i32
    return %arg0, %c0_i32, %c0_i32_0 : i32, i32, i32
  }
  func.func @transform_3(%arg0: i32) -> (i32, i32, i32) {
    %c0_i32 = arith.constant 0 : i32
    %c0_i32_0 = arith.constant 0 : i32
    %c0_i32_1 = arith.constant 0 : i32
    return %arg0, %c0_i32, %c0_i32_0 : i32, i32, i32
  }
  func.func @transform_4(%arg0: i32) -> (i32, i32, i32) {
    %c0_i32 = arith.constant 0 : i32
    %c0_i32_0 = arith.constant 0 : i32
    %c0_i32_1 = arith.constant 0 : i32
    return %arg0, %c0_i32, %c0_i32_0 : i32, i32, i32
  }
}

</mosaic_0001>

<llo_original>
// kernel: tpu_custom_call.1
$region0: #{tpu_custom_call.1}
  #allocation0 [shape = 'u32[]', space=smem, size = 0x4, offset = 0x4, fixed_abs, tag = 'smem constant byte address 0x4 - core index']
  #allocation1 [shape = 'u32[72,128]{1,0:T(1,128)}', space=vmem, size = 0x9000, scoped, tag = 'internal scratch']
  %s0 = inlined_call_operand.vmem [shape: f32[2,8,18,18], index: 0, kind: input, shape index: {}]
  %s1 = inlined_call_operand.vmem [shape: bf16[8,72], index: 1, kind: input, shape index: {}]
  %s2 = inlined_call_operand.hbm [shape: f32[2,8,256], index: 2, kind: output, shape index: {0}]
  %s3 = inlined_call_operand.vmem [shape: f32[2,8,1], index: 3, kind: output, shape index: {1}]
  %s4 = inlined_call_operand.vmem [shape: f32[2,8,1], index: 4, kind: output, shape index: {2}]
  %5 = xla_tuple %s2, %s3, %s4
  %s6 = sld [smem:[#allocation0]]
  $region57: #{tpu_custom_call.1} parent=0
    _
  %s8 = ssub.s32 1, %s6
  %s9 = scalar_select 0, %s8, %s6
  $region1: #{tpu_custom_call.1} parent=0
    #allocation2 [shape = 'u8[16384]{0}', space=vmem, size = 0x4000, scoped, tag = 'output window, operand 0']
    #allocation3 [shape = 's32[2]{0}', space=sflag, size = 0x8, scoped, tag = 'scoped memory for tpu_custom_call.1']
    %10 = vsyncpa [#allocation3], 0
    %s11 = scalar_lea.sflag [#allocation3], 1
    %12 = vsyncpa %s11, 0
    loop: start=0, step=1, limit=4
    $region2: #{tpu_custom_call.1} parent=1 // loop_pre_header
      _
    $region3: #{tpu_custom_call.1} parent=1 // loop_header
      %s14 = sphi 0, %s18
      %p15 = scmp.ge.s32.totalorder %s14, 4
      %s24 = sphi 0, %s26
      %s27 = sphi 0, %s24
      %s28 = sphi 0, %s27
      %s44 = sphi 0, %s28
      %s48 = sphi 0, %s48
      %s50 = sphi 0, %s48
      %s51 = sphi 0, %s50
      %s65 = sphi 0, %s51
      %s71 = sphi 0, %s73
      %s74 = sphi 0, %s71
      %s75 = sphi 0, %s74
      %s91 = sphi 0, %s75
      %s97 = sphi 0, %s99
      %s100 = sphi 0, %s97
      %s101 = sphi 0, %s100
      %s117 = sphi 0, %s101
      %s123 = sphi 0, %s125
      %s126 = sphi 0, %s123
      %s127 = sphi 0, %s126
      %s143 = sphi 0, %s127
    $region4: #{tpu_custom_call.1} parent=1 // loop_header_branch
      %17 = sbr.rel (%p15) target = $region8
    $region5: #{tpu_custom_call.1} parent=1 // loop_body
      %s19 = ssub.s32 %s14, 1
      %s20 = ssub.s32 %s14, 2
      %s21 = sadd.s32 %s14, 1
      %s22 = ssub.s32 %s14, %s21
      %p23 = scmp.eq.s32.totalorder %s22, 0
      %s25 = sadd.s32 %s24, 1
      %s26 = scalar_select %p23, %s24, %s25
      %p29 = pneg %p23
      %p30 = scmp.eq.s32.totalorder %s14, 1
      %p31 = por %p29, %p30
      %p32 = scmp.ne.s32.totalorder %s24, %s27
      %p33 = scmp.eq.s32.totalorder %s14, 0
      %p34 = por %p32, %p33
      %p35 = scmp.ne.s32.totalorder %s24, %s27
      %p36 = scmp.eq.s32.totalorder %s19, 1
      %p37 = por %p35, %p36
      %p38 = scmp.ne.s32.totalorder %s27, %s28
      %p39 = scmp.eq.s32.totalorder %s19, 0
      %p40 = por %p38, %p39
      %p41 = scmp.ne.s32.totalorder %s27, %s28
      %p42 = scmp.eq.s32.totalorder %s20, 1
      %p43 = por %p41, %p42
      %p45 = scmp.ne.s32.totalorder %s28, %s44
      %p46 = scmp.eq.s32.totalorder %s20, 0
      %p47 = por %p45, %p46
      %s49 = sadd.s32 %s48, 1
      %p52 = scmp.eq.s32.totalorder %s14, 1
      %p53 = scmp.ne.s32.totalorder %s48, %s50
      %p54 = scmp.eq.s32.totalorder %s14, 0
      %p55 = por %p53, %p54
      %p56 = scmp.ne.s32.totalorder %s48, %s50
      %p57 = scmp.eq.s32.totalorder %s19, 1
      %p58 = por %p56, %p57
      %p59 = scmp.ne.s32.totalorder %s50, %s51
      %p60 = scmp.eq.s32.totalorder %s19, 0
      %p61 = por %p59, %p60
      %p62 = scmp.ne.s32.totalorder %s50, %s51
      %p63 = scmp.eq.s32.totalorder %s20, 1
      %p64 = por %p62, %p63
      %p66 = scmp.ne.s32.totalorder %s51, %s65
      %p67 = scmp.eq.s32.totalorder %s20, 0
      %p68 = por %p66, %p67
      %s69 = ssub.s32 %s14, %s21
      %p70 = scmp.eq.s32.totalorder %s69, 0
      %s72 = sadd.s32 %s71, 1
      %s73 = scalar_select %p70, %s71, %s72
      %p76 = pneg %p70
      %p77 = scmp.eq.s32.totalorder %s14, 1
      %p78 = por %p76, %p77
      %p79 = scmp.ne.s32.totalorder %s71, %s74
      %p80 = scmp.eq.s32.totalorder %s14, 0
      %p81 = por %p79, %p80
      %p82 = scmp.ne.s32.totalorder %s71, %s74
      %p83 = scmp.eq.s32.totalorder %s19, 1
      %p84 = por %p82, %p83
      %p85 = scmp.ne.s32.totalorder %s74, %s75
      %p86 = scmp.eq.s32.totalorder %s19, 0
      %p87 = por %p85, %p86
      %p88 = scmp.ne.s32.totalorder %s74, %s75
      %p89 = scmp.eq.s32.totalorder %s20, 1
      %p90 = por %p88, %p89
      %p92 = scmp.ne.s32.totalorder %s75, %s91
      %p93 = scmp.eq.s32.totalorder %s20, 0
      %p94 = por %p92, %p93
      %s95 = ssub.s32 %s14, %s21
      %p96 = scmp.eq.s32.totalorder %s95, 0
      %s98 = sadd.s32 %s97, 1
      %s99 = scalar_select %p96, %s97, %s98
      %p102 = pneg %p96
      %p103 = scmp.eq.s32.totalorder %s14, 1
      %p104 = por %p102, %p103
      %p105 = scmp.ne.s32.totalorder %s97, %s100
      %p106 = scmp.eq.s32.totalorder %s14, 0
      %p107 = por %p105, %p106
      %p108 = scmp.ne.s32.totalorder %s97, %s100
      %p109 = scmp.eq.s32.totalorder %s19, 1
      %p110 = por %p108, %p109
      %p111 = scmp.ne.s32.totalorder %s100, %s101
      %p112 = scmp.eq.s32.totalorder %s19, 0
      %p113 = por %p111, %p112
      %p114 = scmp.ne.s32.totalorder %s100, %s101
      %p115 = scmp.eq.s32.totalorder %s20, 1
      %p116 = por %p114, %p115
      %p118 = scmp.ne.s32.totalorder %s101, %s117
      %p119 = scmp.eq.s32.totalorder %s20, 0
      %p120 = por %p118, %p119
      %s121 = ssub.s32 %s14, %s21
      %p122 = scmp.eq.s32.totalorder %s121, 0
      %s124 = sadd.s32 %s123, 1
      %s125 = scalar_select %p122, %s123, %s124
      %p128 = pneg %p122
      %p129 = scmp.eq.s32.totalorder %s14, 1
      %p130 = por %p128, %p129
      %p131 = scmp.ne.s32.totalorder %s123, %s126
      %p132 = scmp.eq.s32.totalorder %s14, 0
      %p133 = por %p131, %p132
      %p134 = scmp.ne.s32.totalorder %s123, %s126
      %p135 = scmp.eq.s32.totalorder %s19, 1
      %p136 = por %p134, %p135
      %p137 = scmp.ne.s32.totalorder %s126, %s127
      %p138 = scmp.eq.s32.totalorder %s19, 0
      %p139 = por %p137, %p138
      %p140 = scmp.ne.s32.totalorder %s126, %s127
      %p141 = scmp.eq.s32.totalorder %s20, 1
      %p142 = por %p140, %p141
      %p144 = scmp.ne.s32.totalorder %s127, %s143
      %p145 = scmp.eq.s32.totalorder %s20, 0
      %p146 = por %p144, %p145
      %p147 = scmp.le.s32.totalorder 1, %s14
      %p148 = scmp.lt.s32.totalorder %s14, 3
      %p149 = pnand %p147, %p148
      %p150 = pneg %p149
      // Predicated region
      $region9: #{tpu_custom_call.1} parent=5 // pred_check
        _
      $region10: #{tpu_custom_call.1} parent=5 // pred_check_branch
        %152 = sbr.rel (%p149) target = $region12
      $region11: #{tpu_custom_call.1} parent=5 // pred_region
        %s153 = ssub.s32 %s14, 1
        // Predicated region
        $region13: #{tpu_custom_call.1} parent=11 // pred_check
          %p154 = pneg %p61
        $region14: #{tpu_custom_call.1} parent=11 // pred_check_branch
          %156 = sbr.rel (%p154) target = $region16
        $region15: #{tpu_custom_call.1} parent=11 // pred_region
          _
        $region16: #{tpu_custom_call.1} parent=11 // pred_fallthru
          _
      $region12: #{tpu_custom_call.1} parent=5 // pred_fallthru
        _
      %p157 = scmp.lt.s32.totalorder %s14, 2
      // Predicated region
      $region17: #{tpu_custom_call.1} parent=5 // pred_check
        %p158 = pneg %p157
      $region18: #{tpu_custom_call.1} parent=5 // pred_check_branch
        %160 = sbr.rel (%p158) target = $region20
      $region19: #{tpu_custom_call.1} parent=5 // pred_region
        // Predicated region
        $region21: #{tpu_custom_call.1} parent=19 // pred_check
          %p161 = pneg %p34
        $region22: #{tpu_custom_call.1} parent=19 // pred_check_branch
          %163 = sbr.rel (%p161) target = $region24
        $region23: #{tpu_custom_call.1} parent=19 // pred_region
          %p164 = scmp.lt.s32.totalorder %s14, 1
          %s165 = scalar_select %p164, %s14, 1
          %s166 = smul.addr %s165, 24
          %s167 = smul.addr %s166, 8
          %s168 = scalar_lea.vmem %s0, %s167
        $region24: #{tpu_custom_call.1} parent=19 // pred_fallthru
          _
      $region20: #{tpu_custom_call.1} parent=5 // pred_fallthru
        _
      %p169 = scmp.le.s32.totalorder 1, %s14
      %p170 = scmp.lt.s32.totalorder %s14, 3
      %p171 = pnand %p169, %p170
      %p172 = pneg %p171
      // Predicated region
      $region25: #{tpu_custom_call.1} parent=5 // pred_check
        _
      $region26: #{tpu_custom_call.1} parent=5 // pred_check_branch
        %174 = sbr.rel (%p171) target = $region28
      $region27: #{tpu_custom_call.1} parent=5 // pred_region
        %s175 = ssub.s32 %s14, 1
        %p176 = scmp.lt.s32.totalorder %s19, 1
        %s177 = scalar_select %p176, %s19, 1
        %s178 = smul.addr %s177, 24
        %s179 = smul.addr %s178, 8
        %s180 = scalar_lea.vmem %s0, %s179
        %p181 = pneg %p40
        %p182 = pneg %p37
        %p183 = pneg %p61
        %p184 = pneg %p58
        %p185 = pneg %p87
        %p186 = pneg %p84
        %s187 = sand.u32 %s74, 1
        %s188 = scalar_lea.sflag [#allocation3], %s187
        %s189 = sand.u32 %s74, 1
        %s190 = smul.addr %s189, 16
        %s191 = scalar_lea.vmem [#allocation2], %s190
        %p192 = pneg %p113
        %p193 = pneg %p110
        %p194 = scmp.lt.s32.totalorder %s19, 1
        %s195 = scalar_select %p194, %s19, 1
        %s196 = smul.addr %s195, 8
        %s197 = scalar_lea.vmem %s3, %s196
        %p198 = pneg %p139
        %p199 = pneg %p136
        %p200 = scmp.lt.s32.totalorder %s19, 1
        %s201 = scalar_select %p200, %s19, 1
        %s202 = smul.addr %s201, 8
        %s203 = scalar_lea.vmem %s4, %s202
        %p204 = scmp.lt.s32.totalorder %s19, 1
        %s205 = scalar_select %p204, %s19, 1
        %s206 = smul.addr %s205, 24
        %s207 = smul.addr %s206, 8
        %s208 = scalar_lea.vmem %s0, %s207
        %p209 = scmp.lt.s32.totalorder %s19, 1
        %s210 = scalar_select %p209, %s19, 1
        %s211 = smul.addr %s210, 8
        %s212 = scalar_lea.vmem %s3, %s211
        %p213 = scmp.lt.s32.totalorder %s19, 1
        %s214 = scalar_select %p213, %s19, 1
        %s215 = smul.addr %s214, 8
        %s216 = scalar_lea.vmem %s4, %s215
        %v218 = vld [vmem:[%s208] sm:$0xff]
        %v219 = vld [vmem:[%s208 + $0x8] sm:$0xff]
        %v220 = vld [vmem:[%s208 + $0x10] sm:$0x3]
        %v221 = vld [vmem:[%s208 + $0x18] sm:$0xff]
        %v222 = vld [vmem:[%s208 + $0x20] sm:$0xff]
        %v223 = vld [vmem:[%s208 + $0x28] sm:$0x3]
        %v224 = vld [vmem:[%s208 + $0x30] sm:$0xff]
        %v225 = vld [vmem:[%s208 + $0x38] sm:$0xff]
        %v226 = vld [vmem:[%s208 + $0x40] sm:$0x3]
        %v227 = vld [vmem:[%s208 + $0x48] sm:$0xff]
        %v228 = vld [vmem:[%s208 + $0x50] sm:$0xff]
        %v229 = vld [vmem:[%s208 + $0x58] sm:$0x3]
        %v230 = vld [vmem:[%s208 + $0x60] sm:$0xff]
        %v231 = vld [vmem:[%s208 + $0x68] sm:$0xff]
        %v232 = vld [vmem:[%s208 + $0x70] sm:$0x3]
        %v233 = vld [vmem:[%s208 + $0x78] sm:$0xff]
        %v234 = vld [vmem:[%s208 + $0x80] sm:$0xff]
        %v235 = vld [vmem:[%s208 + $0x88] sm:$0x3]
        %v236 = vld [vmem:[%s208 + $0x90] sm:$0xff]
        %v237 = vld [vmem:[%s208 + $0x98] sm:$0xff]
        %v238 = vld [vmem:[%s208 + $0xa0] sm:$0x3]
        %v239 = vld [vmem:[%s208 + $0xa8] sm:$0xff]
        %v240 = vld [vmem:[%s208 + $0xb0] sm:$0xff]
        %v241 = vld [vmem:[%s208 + $0xb8] sm:$0x3]
        %v242 = vrot.slane %v224, 4
        %vm243 = vcmask 1047556
        %v244 = vsel %vm243, %v242, %v218
        %v245 = vrot.slane %v218, 4
        %v246 = vsel %vm243, %v224, %v245
        %v248 = vunpack.c.l.s4 1983009808
        %v249 = vunpack.c.0.s8 %v248
        %v250 = vperm.slane %v244, %v249
        %v252 = vunpack.c.l.s4 1983009808
        %v253 = vunpack.c.0.s8 %v252
        %v254 = vperm.slane %v246, %v253
        %v255 = vrot.slane %v227, 4
        %v256 = vsel %vm243, %v255, %v221
        %v257 = vrot.slane %v221, 4
        %v258 = vsel %vm243, %v227, %v257
        %v260 = vunpack.c.l.s4 1983009808
        %v261 = vunpack.c.0.s8 %v260
        %v262 = vperm.slane %v256, %v261
        %v264 = vunpack.c.l.s4 1983009808
        %v265 = vunpack.c.0.s8 %v264
        %v266 = vperm.slane %v258, %v265
        %v267 = vrot.slane %v236, 4
        %v268 = vsel %vm243, %v267, %v230
        %v269 = vrot.slane %v230, 4
        %v270 = vsel %vm243, %v236, %v269
        %v272 = vunpack.c.l.s4 1983009808
        %v273 = vunpack.c.0.s8 %v272
        %v274 = vperm.slane %v268, %v273
        %v276 = vunpack.c.l.s4 1983009808
        %v277 = vunpack.c.0.s8 %v276
        %v278 = vperm.slane %v270, %v277
        %v279 = vrot.slane %v239, 4
        %v280 = vsel %vm243, %v279, %v233
        %v281 = vrot.slane %v233, 4
        %v282 = vsel %vm243, %v239, %v281
        %v284 = vunpack.c.l.s4 1983009808
        %v285 = vunpack.c.0.s8 %v284
        %v286 = vperm.slane %v280, %v285
        %v288 = vunpack.c.l.s4 1983009808
        %v289 = vunpack.c.0.s8 %v288
        %v290 = vperm.slane %v282, %v289
        %v291 = vrot.slane %v262, 4
        %v292 = vsel %vm243, %v291, %v250
        %v293 = vrot.slane %v250, 4
        %v294 = vsel %vm243, %v262, %v293
        %v296 = vunpack.c.l.s4 1934713408
        %v297 = vunpack.c.0.s8 %v296
        %v298 = vperm.slane %v292, %v297
        %v300 = vunpack.c.l.s4 1934713408
        %v301 = vunpack.c.0.s8 %v300
        %v302 = vperm.slane %v294, %v301
        %v303 = vrot.slane %v266, 4
        %v304 = vsel %vm243, %v303, %v254
        %v305 = vrot.slane %v254, 4
        %v306 = vsel %vm243, %v266, %v305
        %v308 = vunpack.c.l.s4 1934713408
        %v309 = vunpack.c.0.s8 %v308
        %v310 = vperm.slane %v304, %v309
        %v312 = vunpack.c.l.s4 1934713408
        %v313 = vunpack.c.0.s8 %v312
        %v314 = vperm.slane %v306, %v313
        %v315 = vrot.slane %v286, 4
        %v316 = vsel %vm243, %v315, %v274
        %v317 = vrot.slane %v274, 4
        %v318 = vsel %vm243, %v286, %v317
        %v320 = vunpack.c.l.s4 1934713408
        %v321 = vunpack.c.0.s8 %v320
        %v322 = vperm.slane %v316, %v321
        %v324 = vunpack.c.l.s4 1934713408
        %v325 = vunpack.c.0.s8 %v324
        %v326 = vperm.slane %v318, %v325
        %v327 = vrot.slane %v290, 4
        %v328 = vsel %vm243, %v327, %v278
        %v329 = vrot.slane %v278, 4
        %v330 = vsel %vm243, %v290, %v329
        %v332 = vunpack.c.l.s4 1934713408
        %v333 = vunpack.c.0.s8 %v332
        %v334 = vperm.slane %v328, %v333
        %v336 = vunpack.c.l.s4 1934713408
        %v337 = vunpack.c.0.s8 %v336
        %v338 = vperm.slane %v330, %v337
        %v339 = vrot.slane %v322, 4
        %v340 = vsel %vm243, %v339, %v298
        %v341 = vrot.slane %v298, 4
        %v342 = vsel %vm243, %v322, %v341
        %v343 = vrot.slane %v326, 4
        %v344 = vsel %vm243, %v343, %v302
        %v345 = vrot.slane %v302, 4
        %v346 = vsel %vm243, %v326, %v345
        %v347 = vrot.slane %v334, 4
        %v348 = vsel %vm243, %v347, %v310
        %v349 = vrot.slane %v310, 4
        %v350 = vsel %vm243, %v334, %v349
        %v351 = vrot.slane %v338, 4
        %v352 = vsel %vm243, %v351, %v314
        %v353 = vrot.slane %v314, 4
        %v354 = vsel %vm243, %v338, %v353
        %v355 = vrot.slane %v225, 4
        %v356 = vsel %vm243, %v355, %v219
        %v357 = vrot.slane %v219, 4
        %v358 = vsel %vm243, %v225, %v357
        %v360 = vunpack.c.l.s4 1983009808
        %v361 = vunpack.c.0.s8 %v360
        %v362 = vperm.slane %v356, %v361
        %v364 = vunpack.c.l.s4 1983009808
        %v365 = vunpack.c.0.s8 %v364
        %v366 = vperm.slane %v358, %v365
        %v367 = vrot.slane %v228, 4
        %v368 = vsel %vm243, %v367, %v222
        %v369 = vrot.slane %v222, 4
        %v370 = vsel %vm243, %v228, %v369
        %v372 = vunpack.c.l.s4 1983009808
        %v373 = vunpack.c.0.s8 %v372
        %v374 = vperm.slane %v368, %v373
        %v376 = vunpack.c.l.s4 1983009808
        %v377 = vunpack.c.0.s8 %v376
        %v378 = vperm.slane %v370, %v377
        %v379 = vrot.slane %v237, 4
        %v380 = vsel %vm243, %v379, %v231
        %v381 = vrot.slane %v231, 4
        %v382 = vsel %vm243, %v237, %v381
        %v384 = vunpack.c.l.s4 1983009808
        %v385 = vunpack.c.0.s8 %v384
        %v386 = vperm.slane %v380, %v385
        %v388 = vunpack.c.l.s4 1983009808
        %v389 = vunpack.c.0.s8 %v388
        %v390 = vperm.slane %v382, %v389
        %v391 = vrot.slane %v240, 4
        %v392 = vsel %vm243, %v391, %v234
        %v393 = vrot.slane %v234, 4
        %v394 = vsel %vm243, %v240, %v393
        %v396 = vunpack.c.l.s4 1983009808
        %v397 = vunpack.c.0.s8 %v396
        %v398 = vperm.slane %v392, %v397
        %v400 = vunpack.c.l.s4 1983009808
        %v401 = vunpack.c.0.s8 %v400
        %v402 = vperm.slane %v394, %v401
        %v403 = vrot.slane %v374, 4
        %v404 = vsel %vm243, %v403, %v362
        %v405 = vrot.slane %v362, 4
        %v406 = vsel %vm243, %v374, %v405
        %v408 = vunpack.c.l.s4 1934713408
        %v409 = vunpack.c.0.s8 %v408
        %v410 = vperm.slane %v404, %v409
        %v412 = vunpack.c.l.s4 1934713408
        %v413 = vunpack.c.0.s8 %v412
        %v414 = vperm.slane %v406, %v413
        %v415 = vrot.slane %v378, 4
        %v416 = vsel %vm243, %v415, %v366
        %v417 = vrot.slane %v366, 4
        %v418 = vsel %vm243, %v378, %v417
        %v420 = vunpack.c.l.s4 1934713408
        %v421 = vunpack.c.0.s8 %v420
        %v422 = vperm.slane %v416, %v421
        %v424 = vunpack.c.l.s4 1934713408
        %v425 = vunpack.c.0.s8 %v424
        %v426 = vperm.slane %v418, %v425
        %v427 = vrot.slane %v398, 4
        %v428 = vsel %vm243, %v427, %v386
        %v429 = vrot.slane %v386, 4
        %v430 = vsel %vm243, %v398, %v429
        %v432 = vunpack.c.l.s4 1934713408
        %v433 = vunpack.c.0.s8 %v432
        %v434 = vperm.slane %v428, %v433
        %v436 = vunpack.c.l.s4 1934713408
        %v437 = vunpack.c.0.s8 %v436
        %v438 = vperm.slane %v430, %v437
        %v439 = vrot.slane %v402, 4
        %v440 = vsel %vm243, %v439, %v390
        %v441 = vrot.slane %v390, 4
        %v442 = vsel %vm243, %v402, %v441
        %v444 = vunpack.c.l.s4 1934713408
        %v445 = vunpack.c.0.s8 %v444
        %v446 = vperm.slane %v440, %v445
        %v448 = vunpack.c.l.s4 1934713408
        %v449 = vunpack.c.0.s8 %v448
        %v450 = vperm.slane %v442, %v449
        %v451 = vrot.slane %v434, 4
        %v452 = vsel %vm243, %v451, %v410
        %v453 = vrot.slane %v410, 4
        %v454 = vsel %vm243, %v434, %v453
        %v455 = vrot.slane %v438, 4
        %v456 = vsel %vm243, %v455, %v414
        %v457 = vrot.slane %v414, 4
        %v458 = vsel %vm243, %v438, %v457
        %v459 = vrot.slane %v446, 4
        %v460 = vsel %vm243, %v459, %v422
        %v461 = vrot.slane %v422, 4
        %v462 = vsel %vm243, %v446, %v461
        %v463 = vrot.slane %v450, 4
        %v464 = vsel %vm243, %v463, %v426
        %v465 = vrot.slane %v426, 4
        %v466 = vsel %vm243, %v450, %v465
        %468 = vrot.lane.b32.xlu0 %v342, 16
        %v469 = vpop.permute.xlu0 %468
        %472 = vrot.lane.b32.xlu0 %v344, 32
        %v473 = vpop.permute.xlu0 %472
        %476 = vrot.lane.b32.xlu0 %v346, 48
        %v477 = vpop.permute.xlu0 %476
        %480 = vrot.lane.b32.xlu0 %v348, 64
        %v481 = vpop.permute.xlu0 %480
        %484 = vrot.lane.b32.xlu0 %v350, 80
        %v485 = vpop.permute.xlu0 %484
        %488 = vrot.lane.b32.xlu0 %v352, 96
        %v489 = vpop.permute.xlu0 %488
        %492 = vrot.lane.b32.xlu0 %v354, 112
        %v493 = vpop.permute.xlu0 %492
        %496 = vrot.lane.b32.xlu0 %v454, 16
        %v497 = vpop.permute.xlu0 %496
        %500 = vrot.lane.b32.xlu0 %v456, 32
        %v501 = vpop.permute.xlu0 %500
        %504 = vrot.lane.b32.xlu0 %v458, 48
        %v505 = vpop.permute.xlu0 %504
        %508 = vrot.lane.b32.xlu0 %v460, 64
        %v509 = vpop.permute.xlu0 %508
        %512 = vrot.lane.b32.xlu0 %v462, 80
        %v513 = vpop.permute.xlu0 %512
        %516 = vrot.lane.b32.xlu0 %v464, 96
        %v517 = vpop.permute.xlu0 %516
        %520 = vrot.lane.b32.xlu0 %v466, 112
        %v521 = vpop.permute.xlu0 %520
        %vm523 = vcmask 130048
        %v524 = vsel %vm523, %v340, %v469
        %vm525 = vcmask 261120
        %v526 = vsel %vm525, %v524, %v473
        %vm527 = vcmask 392192
        %v528 = vsel %vm527, %v526, %v477
        %vm529 = vcmask 523264
        %v530 = vsel %vm529, %v528, %v481
        %vm531 = vcmask 654336
        %v532 = vsel %vm531, %v530, %v485
        %vm533 = vcmask 785408
        %v534 = vsel %vm533, %v532, %v489
        %vm535 = vcmask 916480
        %v536 = vsel %vm535, %v534, %v493
        %v537 = vsel %vm523, %v452, %v497
        %v538 = vsel %vm525, %v537, %v501
        %v539 = vsel %vm527, %v538, %v505
        %v540 = vsel %vm529, %v539, %v509
        %v541 = vsel %vm531, %v540, %v513
        %v542 = vsel %vm533, %v541, %v517
        %v543 = vsel %vm535, %v542, %v521
        %560 = vrot.lane.b32.xlu0 %v218, 127
        %v561 = vpop.permute.xlu0 %560
        %562 = vrot.lane.b32.xlu0 %v219, 127
        %v563 = vpop.permute.xlu0 %562
        %564 = vrot.lane.b32.xlu0 %v221, 127
        %v565 = vpop.permute.xlu0 %564
        %566 = vrot.lane.b32.xlu0 %v222, 127
        %v567 = vpop.permute.xlu0 %566
        %568 = vrot.lane.b32.xlu0 %v224, 127
        %v569 = vpop.permute.xlu0 %568
        %570 = vrot.lane.b32.xlu0 %v225, 127
        %v571 = vpop.permute.xlu0 %570
        %572 = vrot.lane.b32.xlu0 %v227, 127
        %v573 = vpop.permute.xlu0 %572
        %574 = vrot.lane.b32.xlu0 %v228, 127
        %v575 = vpop.permute.xlu0 %574
        %576 = vrot.lane.b32.xlu0 %v230, 127
        %v577 = vpop.permute.xlu0 %576
        %578 = vrot.lane.b32.xlu0 %v231, 127
        %v579 = vpop.permute.xlu0 %578
        %580 = vrot.lane.b32.xlu0 %v233, 127
        %v581 = vpop.permute.xlu0 %580
        %582 = vrot.lane.b32.xlu0 %v234, 127
        %v583 = vpop.permute.xlu0 %582
        %584 = vrot.lane.b32.xlu0 %v236, 127
        %v585 = vpop.permute.xlu0 %584
        %586 = vrot.lane.b32.xlu0 %v237, 127
        %v587 = vpop.permute.xlu0 %586
        %588 = vrot.lane.b32.xlu0 %v239, 127
        %v589 = vpop.permute.xlu0 %588
        %590 = vrot.lane.b32.xlu0 %v240, 127
        %v591 = vpop.permute.xlu0 %590
        %v608 = vrot.slane %v569, 4
        %v609 = vsel %vm243, %v608, %v561
        %v610 = vrot.slane %v561, 4
        %v611 = vsel %vm243, %v569, %v610
        %v613 = vunpack.c.l.s4 1983009808
        %v614 = vunpack.c.0.s8 %v613
        %v615 = vperm.slane %v609, %v614
        %v617 = vunpack.c.l.s4 1983009808
        %v618 = vunpack.c.0.s8 %v617
        %v619 = vperm.slane %v611, %v618
        %v620 = vrot.slane %v573, 4
        %v621 = vsel %vm243, %v620, %v565
        %v622 = vrot.slane %v565, 4
        %v623 = vsel %vm243, %v573, %v622
        %v625 = vunpack.c.l.s4 1983009808
        %v626 = vunpack.c.0.s8 %v625
        %v627 = vperm.slane %v621, %v626
        %v629 = vunpack.c.l.s4 1983009808
        %v630 = vunpack.c.0.s8 %v629
        %v631 = vperm.slane %v623, %v630
        %v632 = vrot.slane %v585, 4
        %v633 = vsel %vm243, %v632, %v577
        %v634 = vrot.slane %v577, 4
        %v635 = vsel %vm243, %v585, %v634
        %v637 = vunpack.c.l.s4 1983009808
        %v638 = vunpack.c.0.s8 %v637
        %v639 = vperm.slane %v633, %v638
        %v641 = vunpack.c.l.s4 1983009808
        %v642 = vunpack.c.0.s8 %v641
        %v643 = vperm.slane %v635, %v642
        %v644 = vrot.slane %v589, 4
        %v645 = vsel %vm243, %v644, %v581
        %v646 = vrot.slane %v581, 4
        %v647 = vsel %vm243, %v589, %v646
        %v649 = vunpack.c.l.s4 1983009808
        %v650 = vunpack.c.0.s8 %v649
        %v651 = vperm.slane %v645, %v650
        %v653 = vunpack.c.l.s4 1983009808
        %v654 = vunpack.c.0.s8 %v653
        %v655 = vperm.slane %v647, %v654
        %v656 = vrot.slane %v627, 4
        %v657 = vsel %vm243, %v656, %v615
        %v658 = vrot.slane %v615, 4
        %v659 = vsel %vm243, %v627, %v658
        %v661 = vunpack.c.l.s4 1934713408
        %v662 = vunpack.c.0.s8 %v661
        %v663 = vperm.slane %v657, %v662
        %v665 = vunpack.c.l.s4 1934713408
        %v666 = vunpack.c.0.s8 %v665
        %v667 = vperm.slane %v659, %v666
        %v668 = vrot.slane %v631, 4
        %v669 = vsel %vm243, %v668, %v619
        %v670 = vrot.slane %v619, 4
        %v671 = vsel %vm243, %v631, %v670
        %v673 = vunpack.c.l.s4 1934713408
        %v674 = vunpack.c.0.s8 %v673
        %v675 = vperm.slane %v669, %v674
        %v677 = vunpack.c.l.s4 1934713408
        %v678 = vunpack.c.0.s8 %v677
        %v679 = vperm.slane %v671, %v678
        %v680 = vrot.slane %v651, 4
        %v681 = vsel %vm243, %v680, %v639
        %v682 = vrot.slane %v639, 4
        %v683 = vsel %vm243, %v651, %v682
        %v685 = vunpack.c.l.s4 1934713408
        %v686 = vunpack.c.0.s8 %v685
        %v687 = vperm.slane %v681, %v686
        %v689 = vunpack.c.l.s4 1934713408
        %v690 = vunpack.c.0.s8 %v689
        %v691 = vperm.slane %v683, %v690
        %v692 = vrot.slane %v655, 4
        %v693 = vsel %vm243, %v692, %v643
        %v694 = vrot.slane %v643, 4
        %v695 = vsel %vm243, %v655, %v694
        %v697 = vunpack.c.l.s4 1934713408
        %v698 = vunpack.c.0.s8 %v697
        %v699 = vperm.slane %v693, %v698
        %v701 = vunpack.c.l.s4 1934713408
        %v702 = vunpack.c.0.s8 %v701
        %v703 = vperm.slane %v695, %v702
        %v704 = vrot.slane %v687, 4
        %v705 = vsel %vm243, %v704, %v663
        %v706 = vrot.slane %v663, 4
        %v707 = vsel %vm243, %v687, %v706
        %v708 = vrot.slane %v691, 4
        %v709 = vsel %vm243, %v708, %v667
        %v710 = vrot.slane %v667, 4
        %v711 = vsel %vm243, %v691, %v710
        %v712 = vrot.slane %v699, 4
        %v713 = vsel %vm243, %v712, %v675
        %v714 = vrot.slane %v675, 4
        %v715 = vsel %vm243, %v699, %v714
        %v716 = vrot.slane %v703, 4
        %v717 = vsel %vm243, %v716, %v679
        %v718 = vrot.slane %v679, 4
        %v719 = vsel %vm243, %v703, %v718
        %v720 = vrot.slane %v571, 4
        %v721 = vsel %vm243, %v720, %v563
        %v722 = vrot.slane %v563, 4
        %v723 = vsel %vm243, %v571, %v722
        %v725 = vunpack.c.l.s4 1983009808
        %v726 = vunpack.c.0.s8 %v725
        %v727 = vperm.slane %v721, %v726
        %v729 = vunpack.c.l.s4 1983009808
        %v730 = vunpack.c.0.s8 %v729
        %v731 = vperm.slane %v723, %v730
        %v732 = vrot.slane %v575, 4
        %v733 = vsel %vm243, %v732, %v567
        %v734 = vrot.slane %v567, 4
        %v735 = vsel %vm243, %v575, %v734
        %v737 = vunpack.c.l.s4 1983009808
        %v738 = vunpack.c.0.s8 %v737
        %v739 = vperm.slane %v733, %v738
        %v741 = vunpack.c.l.s4 1983009808
        %v742 = vunpack.c.0.s8 %v741
        %v743 = vperm.slane %v735, %v742
        %v744 = vrot.slane %v587, 4
        %v745 = vsel %vm243, %v744, %v579
        %v746 = vrot.slane %v579, 4
        %v747 = vsel %vm243, %v587, %v746
        %v749 = vunpack.c.l.s4 1983009808
        %v750 = vunpack.c.0.s8 %v749
        %v751 = vperm.slane %v745, %v750
        %v753 = vunpack.c.l.s4 1983009808
        %v754 = vunpack.c.0.s8 %v753
        %v755 = vperm.slane %v747, %v754
        %v756 = vrot.slane %v591, 4
        %v757 = vsel %vm243, %v756, %v583
        %v758 = vrot.slane %v583, 4
        %v759 = vsel %vm243, %v591, %v758
        %v761 = vunpack.c.l.s4 1983009808
        %v762 = vunpack.c.0.s8 %v761
        %v763 = vperm.slane %v757, %v762
        %v765 = vunpack.c.l.s4 1983009808
        %v766 = vunpack.c.0.s8 %v765
        %v767 = vperm.slane %v759, %v766
        %v768 = vrot.slane %v739, 4
        %v769 = vsel %vm243, %v768, %v727
        %v770 = vrot.slane %v727, 4
        %v771 = vsel %vm243, %v739, %v770
        %v773 = vunpack.c.l.s4 1934713408
        %v774 = vunpack.c.0.s8 %v773
        %v775 = vperm.slane %v769, %v774
        %v777 = vunpack.c.l.s4 1934713408
        %v778 = vunpack.c.0.s8 %v777
        %v779 = vperm.slane %v771, %v778
        %v780 = vrot.slane %v743, 4
        %v781 = vsel %vm243, %v780, %v731
        %v782 = vrot.slane %v731, 4
        %v783 = vsel %vm243, %v743, %v782
        %v785 = vunpack.c.l.s4 1934713408
        %v786 = vunpack.c.0.s8 %v785
        %v787 = vperm.slane %v781, %v786
        %v789 = vunpack.c.l.s4 1934713408
        %v790 = vunpack.c.0.s8 %v789
        %v791 = vperm.slane %v783, %v790
        %v792 = vrot.slane %v763, 4
        %v793 = vsel %vm243, %v792, %v751
        %v794 = vrot.slane %v751, 4
        %v795 = vsel %vm243, %v763, %v794
        %v797 = vunpack.c.l.s4 1934713408
        %v798 = vunpack.c.0.s8 %v797
        %v799 = vperm.slane %v793, %v798
        %v801 = vunpack.c.l.s4 1934713408
        %v802 = vunpack.c.0.s8 %v801
        %v803 = vperm.slane %v795, %v802
        %v804 = vrot.slane %v767, 4
        %v805 = vsel %vm243, %v804, %v755
        %v806 = vrot.slane %v755, 4
        %v807 = vsel %vm243, %v767, %v806
        %v809 = vunpack.c.l.s4 1934713408
        %v810 = vunpack.c.0.s8 %v809
        %v811 = vperm.slane %v805, %v810
        %v813 = vunpack.c.l.s4 1934713408
        %v814 = vunpack.c.0.s8 %v813
        %v815 = vperm.slane %v807, %v814
        %v816 = vrot.slane %v799, 4
        %v817 = vsel %vm243, %v816, %v775
        %v818 = vrot.slane %v775, 4
        %v819 = vsel %vm243, %v799, %v818
        %v820 = vrot.slane %v803, 4
        %v821 = vsel %vm243, %v820, %v779
        %v822 = vrot.slane %v779, 4
        %v823 = vsel %vm243, %v803, %v822
        %v824 = vrot.slane %v811, 4
        %v825 = vsel %vm243, %v824, %v787
        %v826 = vrot.slane %v787, 4
        %v827 = vsel %vm243, %v811, %v826
        %v828 = vrot.slane %v815, 4
        %v829 = vsel %vm243, %v828, %v791
        %v830 = vrot.slane %v791, 4
        %v831 = vsel %vm243, %v815, %v830
        %833 = vrot.lane.b32.xlu0 %v707, 16
        %v834 = vpop.permute.xlu0 %833
        %837 = vrot.lane.b32.xlu0 %v709, 32
        %v838 = vpop.permute.xlu0 %837
        %841 = vrot.lane.b32.xlu0 %v711, 48
        %v842 = vpop.permute.xlu0 %841
        %845 = vrot.lane.b32.xlu0 %v713, 64
        %v846 = vpop.permute.xlu0 %845
        %849 = vrot.lane.b32.xlu0 %v715, 80
        %v850 = vpop.permute.xlu0 %849
        %853 = vrot.lane.b32.xlu0 %v717, 96
        %v854 = vpop.permute.xlu0 %853
        %857 = vrot.lane.b32.xlu0 %v719, 112
        %v858 = vpop.permute.xlu0 %857
        %861 = vrot.lane.b32.xlu0 %v819, 16
        %v862 = vpop.permute.xlu0 %861
        %865 = vrot.lane.b32.xlu0 %v821, 32
        %v866 = vpop.permute.xlu0 %865
        %869 = vrot.lane.b32.xlu0 %v823, 48
        %v870 = vpop.permute.xlu0 %869
        %873 = vrot.lane.b32.xlu0 %v825, 64
        %v874 = vpop.permute.xlu0 %873
        %877 = vrot.lane.b32.xlu0 %v827, 80
        %v878 = vpop.permute.xlu0 %877
        %881 = vrot.lane.b32.xlu0 %v829, 96
        %v882 = vpop.permute.xlu0 %881
        %885 = vrot.lane.b32.xlu0 %v831, 112
        %v886 = vpop.permute.xlu0 %885
        %v888 = vsel %vm523, %v705, %v834
        %v889 = vsel %vm525, %v888, %v838
        %v890 = vsel %vm527, %v889, %v842
        %v891 = vsel %vm529, %v890, %v846
        %v892 = vsel %vm531, %v891, %v850
        %v893 = vsel %vm533, %v892, %v854
        %v894 = vsel %vm535, %v893, %v858
        %v895 = vsel %vm523, %v817, %v862
        %v896 = vsel %vm525, %v895, %v866
        %v897 = vsel %vm527, %v896, %v870
        %v898 = vsel %vm529, %v897, %v874
        %v899 = vsel %vm531, %v898, %v878
        %v900 = vsel %vm533, %v899, %v882
        %v901 = vsel %vm535, %v900, %v886
        %902 = vrot.lane.b32.xlu0 %v218, 126
        %v903 = vpop.permute.xlu0 %902
        %904 = vrot.lane.b32.xlu0 %v219, 126
        %v905 = vpop.permute.xlu0 %904
        %906 = vrot.lane.b32.xlu0 %v221, 126
        %v907 = vpop.permute.xlu0 %906
        %908 = vrot.lane.b32.xlu0 %v222, 126
        %v909 = vpop.permute.xlu0 %908
        %910 = vrot.lane.b32.xlu0 %v224, 126
        %v911 = vpop.permute.xlu0 %910
        %912 = vrot.lane.b32.xlu0 %v225, 126
        %v913 = vpop.permute.xlu0 %912
        %914 = vrot.lane.b32.xlu0 %v227, 126
        %v915 = vpop.permute.xlu0 %914
        %916 = vrot.lane.b32.xlu0 %v228, 126
        %v917 = vpop.permute.xlu0 %916
        %918 = vrot.lane.b32.xlu0 %v230, 126
        %v919 = vpop.permute.xlu0 %918
        %920 = vrot.lane.b32.xlu0 %v231, 126
        %v921 = vpop.permute.xlu0 %920
        %922 = vrot.lane.b32.xlu0 %v233, 126
        %v923 = vpop.permute.xlu0 %922
        %924 = vrot.lane.b32.xlu0 %v234, 126
        %v925 = vpop.permute.xlu0 %924
        %926 = vrot.lane.b32.xlu0 %v236, 126
        %v927 = vpop.permute.xlu0 %926
        %928 = vrot.lane.b32.xlu0 %v237, 126
        %v929 = vpop.permute.xlu0 %928
        %930 = vrot.lane.b32.xlu0 %v239, 126
        %v931 = vpop.permute.xlu0 %930
        %932 = vrot.lane.b32.xlu0 %v240, 126
        %v933 = vpop.permute.xlu0 %932
        %v950 = vrot.slane %v911, 4
        %v951 = vsel %vm243, %v950, %v903
        %v952 = vrot.slane %v903, 4
        %v953 = vsel %vm243, %v911, %v952
        %v955 = vunpack.c.l.s4 1983009808
        %v956 = vunpack.c.0.s8 %v955
        %v957 = vperm.slane %v951, %v956
        %v959 = vunpack.c.l.s4 1983009808
        %v960 = vunpack.c.0.s8 %v959
        %v961 = vperm.slane %v953, %v960
        %v962 = vrot.slane %v915, 4
        %v963 = vsel %vm243, %v962, %v907
        %v964 = vrot.slane %v907, 4
        %v965 = vsel %vm243, %v915, %v964
        %v967 = vunpack.c.l.s4 1983009808
        %v968 = vunpack.c.0.s8 %v967
        %v969 = vperm.slane %v963, %v968
        %v971 = vunpack.c.l.s4 1983009808
        %v972 = vunpack.c.0.s8 %v971
        %v973 = vperm.slane %v965, %v972
        %v974 = vrot.slane %v927, 4
        %v975 = vsel %vm243, %v974, %v919
        %v976 = vrot.slane %v919, 4
        %v977 = vsel %vm243, %v927, %v976
        %v979 = vunpack.c.l.s4 1983009808
        %v980 = vunpack.c.0.s8 %v979
        %v981 = vperm.slane %v975, %v980
        %v983 = vunpack.c.l.s4 1983009808
        %v984 = vunpack.c.0.s8 %v983
        %v985 = vperm.slane %v977, %v984
        %v986 = vrot.slane %v931, 4
        %v987 = vsel %vm243, %v986, %v923
        %v988 = vrot.slane %v923, 4
        %v989 = vsel %vm243, %v931, %v988
        %v991 = vunpack.c.l.s4 1983009808
        %v992 = vunpack.c.0.s8 %v991
        %v993 = vperm.slane %v987, %v992
        %v995 = vunpack.c.l.s4 1983009808
        %v996 = vunpack.c.0.s8 %v995
        %v997 = vperm.slane %v989, %v996
        %v998 = vrot.slane %v969, 4
        %v999 = vsel %vm243, %v998, %v957
        %v1000 = vrot.slane %v957, 4
        %v1001 = vsel %vm243, %v969, %v1000
        %v1003 = vunpack.c.l.s4 1934713408
        %v1004 = vunpack.c.0.s8 %v1003
        %v1005 = vperm.slane %v999, %v1004
        %v1007 = vunpack.c.l.s4 1934713408
        %v1008 = vunpack.c.0.s8 %v1007
        %v1009 = vperm.slane %v1001, %v1008
        %v1010 = vrot.slane %v973, 4
        %v1011 = vsel %vm243, %v1010, %v961
        %v1012 = vrot.slane %v961, 4
        %v1013 = vsel %vm243, %v973, %v1012
        %v1015 = vunpack.c.l.s4 1934713408
        %v1016 = vunpack.c.0.s8 %v1015
        %v1017 = vperm.slane %v1011, %v1016
        %v1019 = vunpack.c.l.s4 1934713408
        %v1020 = vunpack.c.0.s8 %v1019
        %v1021 = vperm.slane %v1013, %v1020
        %v1022 = vrot.slane %v993, 4
        %v1023 = vsel %vm243, %v1022, %v981
        %v1024 = vrot.slane %v981, 4
        %v1025 = vsel %vm243, %v993, %v1024
        %v1027 = vunpack.c.l.s4 1934713408
        %v1028 = vunpack.c.0.s8 %v1027
        %v1029 = vperm.slane %v1023, %v1028
        %v1031 = vunpack.c.l.s4 1934713408
        %v1032 = vunpack.c.0.s8 %v1031
        %v1033 = vperm.slane %v1025, %v1032
        %v1034 = vrot.slane %v997, 4
        %v1035 = vsel %vm243, %v1034, %v985
        %v1036 = vrot.slane %v985, 4
        %v1037 = vsel %vm243, %v997, %v1036
        %v1039 = vunpack.c.l.s4 1934713408
        %v1040 = vunpack.c.0.s8 %v1039
        %v1041 = vperm.slane %v1035, %v1040
        %v1043 = vunpack.c.l.s4 1934713408
        %v1044 = vunpack.c.0.s8 %v1043
        %v1045 = vperm.slane %v1037, %v1044
        %v1046 = vrot.slane %v1029, 4
        %v1047 = vsel %vm243, %v1046, %v1005
        %v1048 = vrot.slane %v1005, 4
        %v1049 = vsel %vm243, %v1029, %v1048
        %v1050 = vrot.slane %v1033, 4
        %v1051 = vsel %vm243, %v1050, %v1009
        %v1052 = vrot.slane %v1009, 4
        %v1053 = vsel %vm243, %v1033, %v1052
        %v1054 = vrot.slane %v1041, 4
        %v1055 = vsel %vm243, %v1054, %v1017
        %v1056 = vrot.slane %v1017, 4
        %v1057 = vsel %vm243, %v1041, %v1056
        %v1058 = vrot.slane %v1045, 4
        %v1059 = vsel %vm243, %v1058, %v1021
        %v1060 = vrot.slane %v1021, 4
        %v1061 = vsel %vm243, %v1045, %v1060
        %v1062 = vrot.slane %v913, 4
        %v1063 = vsel %vm243, %v1062, %v905
        %v1064 = vrot.slane %v905, 4
        %v1065 = vsel %vm243, %v913, %v1064
        %v1067 = vunpack.c.l.s4 1983009808
        %v1068 = vunpack.c.0.s8 %v1067
        %v1069 = vperm.slane %v1063, %v1068
        %v1071 = vunpack.c.l.s4 1983009808
        %v1072 = vunpack.c.0.s8 %v1071
        %v1073 = vperm.slane %v1065, %v1072
        %v1074 = vrot.slane %v917, 4
        %v1075 = vsel %vm243, %v1074, %v909
        %v1076 = vrot.slane %v909, 4
        %v1077 = vsel %vm243, %v917, %v1076
        %v1079 = vunpack.c.l.s4 1983009808
        %v1080 = vunpack.c.0.s8 %v1079
        %v1081 = vperm.slane %v1075, %v1080
        %v1083 = vunpack.c.l.s4 1983009808
        %v1084 = vunpack.c.0.s8 %v1083
        %v1085 = vperm.slane %v1077, %v1084
        %v1086 = vrot.slane %v929, 4
        %v1087 = vsel %vm243, %v1086, %v921
        %v1088 = vrot.slane %v921, 4
        %v1089 = vsel %vm243, %v929, %v1088
        %v1091 = vunpack.c.l.s4 1983009808
        %v1092 = vunpack.c.0.s8 %v1091
        %v1093 = vperm.slane %v1087, %v1092
        %v1095 = vunpack.c.l.s4 1983009808
        %v1096 = vunpack.c.0.s8 %v1095
        %v1097 = vperm.slane %v1089, %v1096
        %v1098 = vrot.slane %v933, 4
        %v1099 = vsel %vm243, %v1098, %v925
        %v1100 = vrot.slane %v925, 4
        %v1101 = vsel %vm243, %v933, %v1100
        %v1103 = vunpack.c.l.s4 1983009808
        %v1104 = vunpack.c.0.s8 %v1103
        %v1105 = vperm.slane %v1099, %v1104
        %v1107 = vunpack.c.l.s4 1983009808
        %v1108 = vunpack.c.0.s8 %v1107
        %v1109 = vperm.slane %v1101, %v1108
        %v1110 = vrot.slane %v1081, 4
        %v1111 = vsel %vm243, %v1110, %v1069
        %v1112 = vrot.slane %v1069, 4
        %v1113 = vsel %vm243, %v1081, %v1112
        %v1115 = vunpack.c.l.s4 1934713408
        %v1116 = vunpack.c.0.s8 %v1115
        %v1117 = vperm.slane %v1111, %v1116
        %v1119 = vunpack.c.l.s4 1934713408
        %v1120 = vunpack.c.0.s8 %v1119
        %v1121 = vperm.slane %v1113, %v1120
        %v1122 = vrot.slane %v1085, 4
        %v1123 = vsel %vm243, %v1122, %v1073
        %v1124 = vrot.slane %v1073, 4
        %v1125 = vsel %vm243, %v1085, %v1124
        %v1127 = vunpack.c.l.s4 1934713408
        %v1128 = vunpack.c.0.s8 %v1127
        %v1129 = vperm.slane %v1123, %v1128
        %v1131 = vunpack.c.l.s4 1934713408
        %v1132 = vunpack.c.0.s8 %v1131
        %v1133 = vperm.slane %v1125, %v1132
        %v1134 = vrot.slane %v1105, 4
        %v1135 = vsel %vm243, %v1134, %v1093
        %v1136 = vrot.slane %v1093, 4
        %v1137 = vsel %vm243, %v1105, %v1136
        %v1139 = vunpack.c.l.s4 1934713408
        %v1140 = vunpack.c.0.s8 %v1139
        %v1141 = vperm.slane %v1135, %v1140
        %v1143 = vunpack.c.l.s4 1934713408
        %v1144 = vunpack.c.0.s8 %v1143
        %v1145 = vperm.slane %v1137, %v1144
        %v1146 = vrot.slane %v1109, 4
        %v1147 = vsel %vm243, %v1146, %v1097
        %v1148 = vrot.slane %v1097, 4
        %v1149 = vsel %vm243, %v1109, %v1148
        %v1151 = vunpack.c.l.s4 1934713408
        %v1152 = vunpack.c.0.s8 %v1151
        %v1153 = vperm.slane %v1147, %v1152
        %v1155 = vunpack.c.l.s4 1934713408
        %v1156 = vunpack.c.0.s8 %v1155
        %v1157 = vperm.slane %v1149, %v1156
        %v1158 = vrot.slane %v1141, 4
        %v1159 = vsel %vm243, %v1158, %v1117
        %v1160 = vrot.slane %v1117, 4
        %v1161 = vsel %vm243, %v1141, %v1160
        %v1162 = vrot.slane %v1145, 4
        %v1163 = vsel %vm243, %v1162, %v1121
        %v1164 = vrot.slane %v1121, 4
        %v1165 = vsel %vm243, %v1145, %v1164
        %v1166 = vrot.slane %v1153, 4
        %v1167 = vsel %vm243, %v1166, %v1129
        %v1168 = vrot.slane %v1129, 4
        %v1169 = vsel %vm243, %v1153, %v1168
        %v1170 = vrot.slane %v1157, 4
        %v1171 = vsel %vm243, %v1170, %v1133
        %v1172 = vrot.slane %v1133, 4
        %v1173 = vsel %vm243, %v1157, %v1172
        %1175 = vrot.lane.b32.xlu0 %v1049, 16
        %v1176 = vpop.permute.xlu0 %1175
        %1179 = vrot.lane.b32.xlu0 %v1051, 32
        %v1180 = vpop.permute.xlu0 %1179
        %1183 = vrot.lane.b32.xlu0 %v1053, 48
        %v1184 = vpop.permute.xlu0 %1183
        %1187 = vrot.lane.b32.xlu0 %v1055, 64
        %v1188 = vpop.permute.xlu0 %1187
        %1191 = vrot.lane.b32.xlu0 %v1057, 80
        %v1192 = vpop.permute.xlu0 %1191
        %1195 = vrot.lane.b32.xlu0 %v1059, 96
        %v1196 = vpop.permute.xlu0 %1195
        %1199 = vrot.lane.b32.xlu0 %v1061, 112
        %v1200 = vpop.permute.xlu0 %1199
        %1203 = vrot.lane.b32.xlu0 %v1161, 16
        %v1204 = vpop.permute.xlu0 %1203
        %1207 = vrot.lane.b32.xlu0 %v1163, 32
        %v1208 = vpop.permute.xlu0 %1207
        %1211 = vrot.lane.b32.xlu0 %v1165, 48
        %v1212 = vpop.permute.xlu0 %1211
        %1215 = vrot.lane.b32.xlu0 %v1167, 64
        %v1216 = vpop.permute.xlu0 %1215
        %1219 = vrot.lane.b32.xlu0 %v1169, 80
        %v1220 = vpop.permute.xlu0 %1219
        %1223 = vrot.lane.b32.xlu0 %v1171, 96
        %v1224 = vpop.permute.xlu0 %1223
        %1227 = vrot.lane.b32.xlu0 %v1173, 112
        %v1228 = vpop.permute.xlu0 %1227
        %v1230 = vsel %vm523, %v1047, %v1176
        %v1231 = vsel %vm525, %v1230, %v1180
        %v1232 = vsel %vm527, %v1231, %v1184
        %v1233 = vsel %vm529, %v1232, %v1188
        %v1234 = vsel %vm531, %v1233, %v1192
        %v1235 = vsel %vm533, %v1234, %v1196
        %v1236 = vsel %vm535, %v1235, %v1200
        %v1237 = vsel %vm523, %v1159, %v1204
        %v1238 = vsel %vm525, %v1237, %v1208
        %v1239 = vsel %vm527, %v1238, %v1212
        %v1240 = vsel %vm529, %v1239, %v1216
        %v1241 = vsel %vm531, %v1240, %v1220
        %v1242 = vsel %vm533, %v1241, %v1224
        %v1243 = vsel %vm535, %v1242, %v1228
        %vm1252 = vcmask 1046528
        %v1253 = vrot.slane %v218, 1
        %v1254 = vrot.slane %v219, 1
        %v1255 = vsel %vm1252, %v1253, %v1254
        %v1256 = vrot.slane %v220, 1
        %v1257 = vsel %vm1252, %v1254, %v1256
        %v1258 = vrot.slane %v221, 1
        %v1259 = vrot.slane %v222, 1
        %v1260 = vsel %vm1252, %v1258, %v1259
        %v1261 = vrot.slane %v223, 1
        %v1262 = vsel %vm1252, %v1259, %v1261
        %v1263 = vrot.slane %v224, 1
        %v1264 = vrot.slane %v225, 1
        %v1265 = vsel %vm1252, %v1263, %v1264
        %v1266 = vrot.slane %v226, 1
        %v1267 = vsel %vm1252, %v1264, %v1266
        %v1268 = vrot.slane %v227, 1
        %v1269 = vrot.slane %v228, 1
        %v1270 = vsel %vm1252, %v1268, %v1269
        %v1271 = vrot.slane %v229, 1
        %v1272 = vsel %vm1252, %v1269, %v1271
        %v1273 = vrot.slane %v230, 1
        %v1274 = vrot.slane %v231, 1
        %v1275 = vsel %vm1252, %v1273, %v1274
        %v1276 = vrot.slane %v232, 1
        %v1277 = vsel %vm1252, %v1274, %v1276
        %v1278 = vrot.slane %v233, 1
        %v1279 = vrot.slane %v234, 1
        %v1280 = vsel %vm1252, %v1278, %v1279
        %v1281 = vrot.slane %v235, 1
        %v1282 = vsel %vm1252, %v1279, %v1281
        %v1283 = vrot.slane %v236, 1
        %v1284 = vrot.slane %v237, 1
        %v1285 = vsel %vm1252, %v1283, %v1284
        %v1286 = vrot.slane %v238, 1
        %v1287 = vsel %vm1252, %v1284, %v1286
        %v1288 = vrot.slane %v239, 1
        %v1289 = vrot.slane %v240, 1
        %v1290 = vsel %vm1252, %v1288, %v1289
        %v1291 = vrot.slane %v241, 1
        %v1292 = vsel %vm1252, %v1289, %v1291
        %v1309 = vrot.slane %v1265, 4
        %v1310 = vsel %vm243, %v1309, %v1255
        %v1311 = vrot.slane %v1255, 4
        %v1312 = vsel %vm243, %v1265, %v1311
        %v1314 = vunpack.c.l.s4 1983009808
        %v1315 = vunpack.c.0.s8 %v1314
        %v1316 = vperm.slane %v1310, %v1315
        %v1318 = vunpack.c.l.s4 1983009808
        %v1319 = vunpack.c.0.s8 %v1318
        %v1320 = vperm.slane %v1312, %v1319
        %v1321 = vrot.slane %v1270, 4
        %v1322 = vsel %vm243, %v1321, %v1260
        %v1323 = vrot.slane %v1260, 4
        %v1324 = vsel %vm243, %v1270, %v1323
        %v1326 = vunpack.c.l.s4 1983009808
        %v1327 = vunpack.c.0.s8 %v1326
        %v1328 = vperm.slane %v1322, %v1327
        %v1330 = vunpack.c.l.s4 1983009808
        %v1331 = vunpack.c.0.s8 %v1330
        %v1332 = vperm.slane %v1324, %v1331
        %v1333 = vrot.slane %v1285, 4
        %v1334 = vsel %vm243, %v1333, %v1275
        %v1335 = vrot.slane %v1275, 4
        %v1336 = vsel %vm243, %v1285, %v1335
        %v1338 = vunpack.c.l.s4 1983009808
        %v1339 = vunpack.c.0.s8 %v1338
        %v1340 = vperm.slane %v1334, %v1339
        %v1342 = vunpack.c.l.s4 1983009808
        %v1343 = vunpack.c.0.s8 %v1342
        %v1344 = vperm.slane %v1336, %v1343
        %v1345 = vrot.slane %v1290, 4
        %v1346 = vsel %vm243, %v1345, %v1280
        %v1347 = vrot.slane %v1280, 4
        %v1348 = vsel %vm243, %v1290, %v1347
        %v1350 = vunpack.c.l.s4 1983009808
        %v1351 = vunpack.c.0.s8 %v1350
        %v1352 = vperm.slane %v1346, %v1351
        %v1354 = vunpack.c.l.s4 1983009808
        %v1355 = vunpack.c.0.s8 %v1354
        %v1356 = vperm.slane %v1348, %v1355
        %v1357 = vrot.slane %v1328, 4
        %v1358 = vsel %vm243, %v1357, %v1316
        %v1359 = vrot.slane %v1316, 4
        %v1360 = vsel %vm243, %v1328, %v1359
        %v1362 = vunpack.c.l.s4 1934713408
        %v1363 = vunpack.c.0.s8 %v1362
        %v1364 = vperm.slane %v1358, %v1363
        %v1366 = vunpack.c.l.s4 1934713408
        %v1367 = vunpack.c.0.s8 %v1366
        %v1368 = vperm.slane %v1360, %v1367
        %v1369 = vrot.slane %v1332, 4
        %v1370 = vsel %vm243, %v1369, %v1320
        %v1371 = vrot.slane %v1320, 4
        %v1372 = vsel %vm243, %v1332, %v1371
        %v1374 = vunpack.c.l.s4 1934713408
        %v1375 = vunpack.c.0.s8 %v1374
        %v1376 = vperm.slane %v1370, %v1375
        %v1378 = vunpack.c.l.s4 1934713408
        %v1379 = vunpack.c.0.s8 %v1378
        %v1380 = vperm.slane %v1372, %v1379
        %v1381 = vrot.slane %v1352, 4
        %v1382 = vsel %vm243, %v1381, %v1340
        %v1383 = vrot.slane %v1340, 4
        %v1384 = vsel %vm243, %v1352, %v1383
        %v1386 = vunpack.c.l.s4 1934713408
        %v1387 = vunpack.c.0.s8 %v1386
        %v1388 = vperm.slane %v1382, %v1387
        %v1390 = vunpack.c.l.s4 1934713408
        %v1391 = vunpack.c.0.s8 %v1390
        %v1392 = vperm.slane %v1384, %v1391
        %v1393 = vrot.slane %v1356, 4
        %v1394 = vsel %vm243, %v1393, %v1344
        %v1395 = vrot.slane %v1344, 4
        %v1396 = vsel %vm243, %v1356, %v1395
        %v1398 = vunpack.c.l.s4 1934713408
        %v1399 = vunpack.c.0.s8 %v1398
        %v1400 = vperm.slane %v1394, %v1399
        %v1402 = vunpack.c.l.s4 1934713408
        %v1403 = vunpack.c.0.s8 %v1402
        %v1404 = vperm.slane %v1396, %v1403
        %v1405 = vrot.slane %v1388, 4
        %v1406 = vsel %vm243, %v1405, %v1364
        %v1407 = vrot.slane %v1364, 4
        %v1408 = vsel %vm243, %v1388, %v1407
        %v1409 = vrot.slane %v1392, 4
        %v1410 = vsel %vm243, %v1409, %v1368
        %v1411 = vrot.slane %v1368, 4
        %v1412 = vsel %vm243, %v1392, %v1411
        %v1413 = vrot.slane %v1400, 4
        %v1414 = vsel %vm243, %v1413, %v1376
        %v1415 = vrot.slane %v1376, 4
        %v1416 = vsel %vm243, %v1400, %v1415
        %v1417 = vrot.slane %v1404, 4
        %v1418 = vsel %vm243, %v1417, %v1380
        %v1419 = vrot.slane %v1380, 4
        %v1420 = vsel %vm243, %v1404, %v1419
        %v1421 = vrot.slane %v1267, 4
        %v1422 = vsel %vm243, %v1421, %v1257
        %v1423 = vrot.slane %v1257, 4
        %v1424 = vsel %vm243, %v1267, %v1423
        %v1426 = vunpack.c.l.s4 1983009808
        %v1427 = vunpack.c.0.s8 %v1426
        %v1428 = vperm.slane %v1422, %v1427
        %v1430 = vunpack.c.l.s4 1983009808
        %v1431 = vunpack.c.0.s8 %v1430
        %v1432 = vperm.slane %v1424, %v1431
        %v1433 = vrot.slane %v1272, 4
        %v1434 = vsel %vm243, %v1433, %v1262
        %v1435 = vrot.slane %v1262, 4
        %v1436 = vsel %vm243, %v1272, %v1435
        %v1438 = vunpack.c.l.s4 1983009808
        %v1439 = vunpack.c.0.s8 %v1438
        %v1440 = vperm.slane %v1434, %v1439
        %v1442 = vunpack.c.l.s4 1983009808
        %v1443 = vunpack.c.0.s8 %v1442
        %v1444 = vperm.slane %v1436, %v1443
        %v1445 = vrot.slane %v1287, 4
        %v1446 = vsel %vm243, %v1445, %v1277
        %v1447 = vrot.slane %v1277, 4
        %v1448 = vsel %vm243, %v1287, %v1447
        %v1450 = vunpack.c.l.s4 1983009808
        %v1451 = vunpack.c.0.s8 %v1450
        %v1452 = vperm.slane %v1446, %v1451
        %v1454 = vunpack.c.l.s4 1983009808
        %v1455 = vunpack.c.0.s8 %v1454
        %v1456 = vperm.slane %v1448, %v1455
        %v1457 = vrot.slane %v1292, 4
        %v1458 = vsel %vm243, %v1457, %v1282
        %v1459 = vrot.slane %v1282, 4
        %v1460 = vsel %vm243, %v1292, %v1459
        %v1462 = vunpack.c.l.s4 1983009808
        %v1463 = vunpack.c.0.s8 %v1462
        %v1464 = vperm.slane %v1458, %v1463
        %v1466 = vunpack.c.l.s4 1983009808
        %v1467 = vunpack.c.0.s8 %v1466
        %v1468 = vperm.slane %v1460, %v1467
        %v1469 = vrot.slane %v1440, 4
        %v1470 = vsel %vm243, %v1469, %v1428
        %v1471 = vrot.slane %v1428, 4
        %v1472 = vsel %vm243, %v1440, %v1471
        %v1474 = vunpack.c.l.s4 1934713408
        %v1475 = vunpack.c.0.s8 %v1474
        %v1476 = vperm.slane %v1470, %v1475
        %v1478 = vunpack.c.l.s4 1934713408
        %v1479 = vunpack.c.0.s8 %v1478
        %v1480 = vperm.slane %v1472, %v1479
        %v1481 = vrot.slane %v1444, 4
        %v1482 = vsel %vm243, %v1481, %v1432
        %v1483 = vrot.slane %v1432, 4
        %v1484 = vsel %vm243, %v1444, %v1483
        %v1486 = vunpack.c.l.s4 1934713408
        %v1487 = vunpack.c.0.s8 %v1486
        %v1488 = vperm.slane %v1482, %v1487
        %v1490 = vunpack.c.l.s4 1934713408
        %v1491 = vunpack.c.0.s8 %v1490
        %v1492 = vperm.slane %v1484, %v1491
        %v1493 = vrot.slane %v1464, 4
        %v1494 = vsel %vm243, %v1493, %v1452
        %v1495 = vrot.slane %v1452, 4
        %v1496 = vsel %vm243, %v1464, %v1495
        %v1498 = vunpack.c.l.s4 1934713408
        %v1499 = vunpack.c.0.s8 %v1498
        %v1500 = vperm.slane %v1494, %v1499
        %v1502 = vunpack.c.l.s4 1934713408
        %v1503 = vunpack.c.0.s8 %v1502
        %v1504 = vperm.slane %v1496, %v1503
        %v1505 = vrot.slane %v1468, 4
        %v1506 = vsel %vm243, %v1505, %v1456
        %v1507 = vrot.slane %v1456, 4
        %v1508 = vsel %vm243, %v1468, %v1507
        %v1510 = vunpack.c.l.s4 1934713408
        %v1511 = vunpack.c.0.s8 %v1510
        %v1512 = vperm.slane %v1506, %v1511
        %v1514 = vunpack.c.l.s4 1934713408
        %v1515 = vunpack.c.0.s8 %v1514
        %v1516 = vperm.slane %v1508, %v1515
        %v1517 = vrot.slane %v1500, 4
        %v1518 = vsel %vm243, %v1517, %v1476
        %v1519 = vrot.slane %v1476, 4
        %v1520 = vsel %vm243, %v1500, %v1519
        %v1521 = vrot.slane %v1504, 4
        %v1522 = vsel %vm243, %v1521, %v1480
        %v1523 = vrot.slane %v1480, 4
        %v1524 = vsel %vm243, %v1504, %v1523
        %v1525 = vrot.slane %v1512, 4
        %v1526 = vsel %vm243, %v1525, %v1488
        %v1527 = vrot.slane %v1488, 4
        %v1528 = vsel %vm243, %v1512, %v1527
        %v1529 = vrot.slane %v1516, 4
        %v1530 = vsel %vm243, %v1529, %v1492
        %v1531 = vrot.slane %v1492, 4
        %v1532 = vsel %vm243, %v1516, %v1531
        %1534 = vrot.lane.b32.xlu0 %v1408, 16
        %v1535 = vpop.permute.xlu0 %1534
        %1538 = vrot.lane.b32.xlu0 %v1410, 32
        %v1539 = vpop.permute.xlu0 %1538
        %1542 = vrot.lane.b32.xlu0 %v1412, 48
        %v1543 = vpop.permute.xlu0 %1542
        %1546 = vrot.lane.b32.xlu0 %v1414, 64
        %v1547 = vpop.permute.xlu0 %1546
        %1550 = vrot.lane.b32.xlu0 %v1416, 80
        %v1551 = vpop.permute.xlu0 %1550
        %1554 = vrot.lane.b32.xlu0 %v1418, 96
        %v1555 = vpop.permute.xlu0 %1554
        %1558 = vrot.lane.b32.xlu0 %v1420, 112
        %v1559 = vpop.permute.xlu0 %1558
        %1562 = vrot.lane.b32.xlu0 %v1520, 16
        %v1563 = vpop.permute.xlu0 %1562
        %1566 = vrot.lane.b32.xlu0 %v1522, 32
        %v1567 = vpop.permute.xlu0 %1566
        %1570 = vrot.lane.b32.xlu0 %v1524, 48
        %v1571 = vpop.permute.xlu0 %1570
        %1574 = vrot.lane.b32.xlu0 %v1526, 64
        %v1575 = vpop.permute.xlu0 %1574
        %1578 = vrot.lane.b32.xlu0 %v1528, 80
        %v1579 = vpop.permute.xlu0 %1578
        %1582 = vrot.lane.b32.xlu0 %v1530, 96
        %v1583 = vpop.permute.xlu0 %1582
        %1586 = vrot.lane.b32.xlu0 %v1532, 112
        %v1587 = vpop.permute.xlu0 %1586
        %v1589 = vsel %vm523, %v1406, %v1535
        %v1590 = vsel %vm525, %v1589, %v1539
        %v1591 = vsel %vm527, %v1590, %v1543
        %v1592 = vsel %vm529, %v1591, %v1547
        %v1593 = vsel %vm531, %v1592, %v1551
        %v1594 = vsel %vm533, %v1593, %v1555
        %v1595 = vsel %vm535, %v1594, %v1559
        %v1596 = vsel %vm523, %v1518, %v1563
        %v1597 = vsel %vm525, %v1596, %v1567
        %v1598 = vsel %vm527, %v1597, %v1571
        %v1599 = vsel %vm529, %v1598, %v1575
        %v1600 = vsel %vm531, %v1599, %v1579
        %v1601 = vsel %vm533, %v1600, %v1583
        %v1602 = vsel %vm535, %v1601, %v1587
        %1603 = vrot.lane.b32.xlu0 %v1255, 127
        %v1604 = vpop.permute.xlu0 %1603
        %1605 = vrot.lane.b32.xlu0 %v1257, 127
        %v1606 = vpop.permute.xlu0 %1605
        %1607 = vrot.lane.b32.xlu0 %v1260, 127
        %v1608 = vpop.permute.xlu0 %1607
        %1609 = vrot.lane.b32.xlu0 %v1262, 127
        %v1610 = vpop.permute.xlu0 %1609
        %1611 = vrot.lane.b32.xlu0 %v1265, 127
        %v1612 = vpop.permute.xlu0 %1611
        %1613 = vrot.lane.b32.xlu0 %v1267, 127
        %v1614 = vpop.permute.xlu0 %1613
        %1615 = vrot.lane.b32.xlu0 %v1270, 127
        %v1616 = vpop.permute.xlu0 %1615
        %1617 = vrot.lane.b32.xlu0 %v1272, 127
        %v1618 = vpop.permute.xlu0 %1617
        %1619 = vrot.lane.b32.xlu0 %v1275, 127
        %v1620 = vpop.permute.xlu0 %1619
        %1621 = vrot.lane.b32.xlu0 %v1277, 127
        %v1622 = vpop.permute.xlu0 %1621
        %1623 = vrot.lane.b32.xlu0 %v1280, 127
        %v1624 = vpop.permute.xlu0 %1623
        %1625 = vrot.lane.b32.xlu0 %v1282, 127
        %v1626 = vpop.permute.xlu0 %1625
        %1627 = vrot.lane.b32.xlu0 %v1285, 127
        %v1628 = vpop.permute.xlu0 %1627
        %1629 = vrot.lane.b32.xlu0 %v1287, 127
        %v1630 = vpop.permute.xlu0 %1629
        %1631 = vrot.lane.b32.xlu0 %v1290, 127
        %v1632 = vpop.permute.xlu0 %1631
        %1633 = vrot.lane.b32.xlu0 %v1292, 127
        %v1634 = vpop.permute.xlu0 %1633
        %v1651 = vrot.slane %v1612, 4
        %v1652 = vsel %vm243, %v1651, %v1604
        %v1653 = vrot.slane %v1604, 4
        %v1654 = vsel %vm243, %v1612, %v1653
        %v1656 = vunpack.c.l.s4 1983009808
        %v1657 = vunpack.c.0.s8 %v1656
        %v1658 = vperm.slane %v1652, %v1657
        %v1660 = vunpack.c.l.s4 1983009808
        %v1661 = vunpack.c.0.s8 %v1660
        %v1662 = vperm.slane %v1654, %v1661
        %v1663 = vrot.slane %v1616, 4
        %v1664 = vsel %vm243, %v1663, %v1608
        %v1665 = vrot.slane %v1608, 4
        %v1666 = vsel %vm243, %v1616, %v1665
        %v1668 = vunpack.c.l.s4 1983009808
        %v1669 = vunpack.c.0.s8 %v1668
        %v1670 = vperm.slane %v1664, %v1669
        %v1672 = vunpack.c.l.s4 1983009808
        %v1673 = vunpack.c.0.s8 %v1672
        %v1674 = vperm.slane %v1666, %v1673
        %v1675 = vrot.slane %v1628, 4
        %v1676 = vsel %vm243, %v1675, %v1620
        %v1677 = vrot.slane %v1620, 4
        %v1678 = vsel %vm243, %v1628, %v1677
        %v1680 = vunpack.c.l.s4 1983009808
        %v1681 = vunpack.c.0.s8 %v1680
        %v1682 = vperm.slane %v1676, %v1681
        %v1684 = vunpack.c.l.s4 1983009808
        %v1685 = vunpack.c.0.s8 %v1684
        %v1686 = vperm.slane %v1678, %v1685
        %v1687 = vrot.slane %v1632, 4
        %v1688 = vsel %vm243, %v1687, %v1624
        %v1689 = vrot.slane %v1624, 4
        %v1690 = vsel %vm243, %v1632, %v1689
        %v1692 = vunpack.c.l.s4 1983009808
        %v1693 = vunpack.c.0.s8 %v1692
        %v1694 = vperm.slane %v1688, %v1693
        %v1696 = vunpack.c.l.s4 1983009808
        %v1697 = vunpack.c.0.s8 %v1696
        %v1698 = vperm.slane %v1690, %v1697
        %v1699 = vrot.slane %v1670, 4
        %v1700 = vsel %vm243, %v1699, %v1658
        %v1701 = vrot.slane %v1658, 4
        %v1702 = vsel %vm243, %v1670, %v1701
        %v1704 = vunpack.c.l.s4 1934713408
        %v1705 = vunpack.c.0.s8 %v1704
        %v1706 = vperm.slane %v1700, %v1705
        %v1708 = vunpack.c.l.s4 1934713408
        %v1709 = vunpack.c.0.s8 %v1708
        %v1710 = vperm.slane %v1702, %v1709
        %v1711 = vrot.slane %v1674, 4
        %v1712 = vsel %vm243, %v1711, %v1662
        %v1713 = vrot.slane %v1662, 4
        %v1714 = vsel %vm243, %v1674, %v1713
        %v1716 = vunpack.c.l.s4 1934713408
        %v1717 = vunpack.c.0.s8 %v1716
        %v1718 = vperm.slane %v1712, %v1717
        %v1720 = vunpack.c.l.s4 1934713408
        %v1721 = vunpack.c.0.s8 %v1720
        %v1722 = vperm.slane %v1714, %v1721
        %v1723 = vrot.slane %v1694, 4
        %v1724 = vsel %vm243, %v1723, %v1682
        %v1725 = vrot.slane %v1682, 4
        %v1726 = vsel %vm243, %v1694, %v1725
        %v1728 = vunpack.c.l.s4 1934713408
        %v1729 = vunpack.c.0.s8 %v1728
        %v1730 = vperm.slane %v1724, %v1729
        %v1732 = vunpack.c.l.s4 1934713408
        %v1733 = vunpack.c.0.s8 %v1732
        %v1734 = vperm.slane %v1726, %v1733
        %v1735 = vrot.slane %v1698, 4
        %v1736 = vsel %vm243, %v1735, %v1686
        %v1737 = vrot.slane %v1686, 4
        %v1738 = vsel %vm243, %v1698, %v1737
        %v1740 = vunpack.c.l.s4 1934713408
        %v1741 = vunpack.c.0.s8 %v1740
        %v1742 = vperm.slane %v1736, %v1741
        %v1744 = vunpack.c.l.s4 1934713408
        %v1745 = vunpack.c.0.s8 %v1744
        %v1746 = vperm.slane %v1738, %v1745
        %v1747 = vrot.slane %v1730, 4
        %v1748 = vsel %vm243, %v1747, %v1706
        %v1749 = vrot.slane %v1706, 4
        %v1750 = vsel %vm243, %v1730, %v1749
        %v1751 = vrot.slane %v1734, 4
        %v1752 = vsel %vm243, %v1751, %v1710
        %v1753 = vrot.slane %v1710, 4
        %v1754 = vsel %vm243, %v1734, %v1753
        %v1755 = vrot.slane %v1742, 4
        %v1756 = vsel %vm243, %v1755, %v1718
        %v1757 = vrot.slane %v1718, 4
        %v1758 = vsel %vm243, %v1742, %v1757
        %v1759 = vrot.slane %v1746, 4
        %v1760 = vsel %vm243, %v1759, %v1722
        %v1761 = vrot.slane %v1722, 4
        %v1762 = vsel %vm243, %v1746, %v1761
        %v1763 = vrot.slane %v1614, 4
        %v1764 = vsel %vm243, %v1763, %v1606
        %v1765 = vrot.slane %v1606, 4
        %v1766 = vsel %vm243, %v1614, %v1765
        %v1768 = vunpack.c.l.s4 1983009808
        %v1769 = vunpack.c.0.s8 %v1768
        %v1770 = vperm.slane %v1764, %v1769
        %v1772 = vunpack.c.l.s4 1983009808
        %v1773 = vunpack.c.0.s8 %v1772
        %v1774 = vperm.slane %v1766, %v1773
        %v1775 = vrot.slane %v1618, 4
        %v1776 = vsel %vm243, %v1775, %v1610
        %v1777 = vrot.slane %v1610, 4
        %v1778 = vsel %vm243, %v1618, %v1777
        %v1780 = vunpack.c.l.s4 1983009808
        %v1781 = vunpack.c.0.s8 %v1780
        %v1782 = vperm.slane %v1776, %v1781
        %v1784 = vunpack.c.l.s4 1983009808
        %v1785 = vunpack.c.0.s8 %v1784
        %v1786 = vperm.slane %v1778, %v1785
        %v1787 = vrot.slane %v1630, 4
        %v1788 = vsel %vm243, %v1787, %v1622
        %v1789 = vrot.slane %v1622, 4
        %v1790 = vsel %vm243, %v1630, %v1789
        %v1792 = vunpack.c.l.s4 1983009808
        %v1793 = vunpack.c.0.s8 %v1792
        %v1794 = vperm.slane %v1788, %v1793
        %v1796 = vunpack.c.l.s4 1983009808
        %v1797 = vunpack.c.0.s8 %v1796
        %v1798 = vperm.slane %v1790, %v1797
        %v1799 = vrot.slane %v1634, 4
        %v1800 = vsel %vm243, %v1799, %v1626
        %v1801 = vrot.slane %v1626, 4
        %v1802 = vsel %vm243, %v1634, %v1801
        %v1804 = vunpack.c.l.s4 1983009808
        %v1805 = vunpack.c.0.s8 %v1804
        %v1806 = vperm.slane %v1800, %v1805
        %v1808 = vunpack.c.l.s4 1983009808
        %v1809 = vunpack.c.0.s8 %v1808
        %v1810 = vperm.slane %v1802, %v1809
        %v1811 = vrot.slane %v1782, 4
        %v1812 = vsel %vm243, %v1811, %v1770
        %v1813 = vrot.slane %v1770, 4
        %v1814 = vsel %vm243, %v1782, %v1813
        %v1816 = vunpack.c.l.s4 1934713408
        %v1817 = vunpack.c.0.s8 %v1816
        %v1818 = vperm.slane %v1812, %v1817
        %v1820 = vunpack.c.l.s4 1934713408
        %v1821 = vunpack.c.0.s8 %v1820
        %v1822 = vperm.slane %v1814, %v1821
        %v1823 = vrot.slane %v1786, 4
        %v1824 = vsel %vm243, %v1823, %v1774
        %v1825 = vrot.slane %v1774, 4
        %v1826 = vsel %vm243, %v1786, %v1825
        %v1828 = vunpack.c.l.s4 1934713408
        %v1829 = vunpack.c.0.s8 %v1828
        %v1830 = vperm.slane %v1824, %v1829
        %v1832 = vunpack.c.l.s4 1934713408
        %v1833 = vunpack.c.0.s8 %v1832
        %v1834 = vperm.slane %v1826, %v1833
        %v1835 = vrot.slane %v1806, 4
        %v1836 = vsel %vm243, %v1835, %v1794
        %v1837 = vrot.slane %v1794, 4
        %v1838 = vsel %vm243, %v1806, %v1837
        %v1840 = vunpack.c.l.s4 1934713408
        %v1841 = vunpack.c.0.s8 %v1840
        %v1842 = vperm.slane %v1836, %v1841
        %v1844 = vunpack.c.l.s4 1934713408
        %v1845 = vunpack.c.0.s8 %v1844
        %v1846 = vperm.slane %v1838, %v1845
        %v1847 = vrot.slane %v1810, 4
        %v1848 = vsel %vm243, %v1847, %v1798
        %v1849 = vrot.slane %v1798, 4
        %v1850 = vsel %vm243, %v1810, %v1849
        %v1852 = vunpack.c.l.s4 1934713408
        %v1853 = vunpack.c.0.s8 %v1852
        %v1854 = vperm.slane %v1848, %v1853
        %v1856 = vunpack.c.l.s4 1934713408
        %v1857 = vunpack.c.0.s8 %v1856
        %v1858 = vperm.slane %v1850, %v1857
        %v1859 = vrot.slane %v1842, 4
        %v1860 = vsel %vm243, %v1859, %v1818
        %v1861 = vrot.slane %v1818, 4
        %v1862 = vsel %vm243, %v1842, %v1861
        %v1863 = vrot.slane %v1846, 4
        %v1864 = vsel %vm243, %v1863, %v1822
        %v1865 = vrot.slane %v1822, 4
        %v1866 = vsel %vm243, %v1846, %v1865
        %v1867 = vrot.slane %v1854, 4
        %v1868 = vsel %vm243, %v1867, %v1830
        %v1869 = vrot.slane %v1830, 4
        %v1870 = vsel %vm243, %v1854, %v1869
        %v1871 = vrot.slane %v1858, 4
        %v1872 = vsel %vm243, %v1871, %v1834
        %v1873 = vrot.slane %v1834, 4
        %v1874 = vsel %vm243, %v1858, %v1873
        %1876 = vrot.lane.b32.xlu0 %v1750, 16
        %v1877 = vpop.permute.xlu0 %1876
        %1880 = vrot.lane.b32.xlu0 %v1752, 32
        %v1881 = vpop.permute.xlu0 %1880
        %1884 = vrot.lane.b32.xlu0 %v1754, 48
        %v1885 = vpop.permute.xlu0 %1884
        %1888 = vrot.lane.b32.xlu0 %v1756, 64
        %v1889 = vpop.permute.xlu0 %1888
        %1892 = vrot.lane.b32.xlu0 %v1758, 80
        %v1893 = vpop.permute.xlu0 %1892
        %1896 = vrot.lane.b32.xlu0 %v1760, 96
        %v1897 = vpop.permute.xlu0 %1896
        %1900 = vrot.lane.b32.xlu0 %v1762, 112
        %v1901 = vpop.permute.xlu0 %1900
        %1904 = vrot.lane.b32.xlu0 %v1862, 16
        %v1905 = vpop.permute.xlu0 %1904
        %1908 = vrot.lane.b32.xlu0 %v1864, 32
        %v1909 = vpop.permute.xlu0 %1908
        %1912 = vrot.lane.b32.xlu0 %v1866, 48
        %v1913 = vpop.permute.xlu0 %1912
        %1916 = vrot.lane.b32.xlu0 %v1868, 64
        %v1917 = vpop.permute.xlu0 %1916
        %1920 = vrot.lane.b32.xlu0 %v1870, 80
        %v1921 = vpop.permute.xlu0 %1920
        %1924 = vrot.lane.b32.xlu0 %v1872, 96
        %v1925 = vpop.permute.xlu0 %1924
        %1928 = vrot.lane.b32.xlu0 %v1874, 112
        %v1929 = vpop.permute.xlu0 %1928
        %v1931 = vsel %vm523, %v1748, %v1877
        %v1932 = vsel %vm525, %v1931, %v1881
        %v1933 = vsel %vm527, %v1932, %v1885
        %v1934 = vsel %vm529, %v1933, %v1889
        %v1935 = vsel %vm531, %v1934, %v1893
        %v1936 = vsel %vm533, %v1935, %v1897
        %v1937 = vsel %vm535, %v1936, %v1901
        %v1938 = vsel %vm523, %v1860, %v1905
        %v1939 = vsel %vm525, %v1938, %v1909
        %v1940 = vsel %vm527, %v1939, %v1913
        %v1941 = vsel %vm529, %v1940, %v1917
        %v1942 = vsel %vm531, %v1941, %v1921
        %v1943 = vsel %vm533, %v1942, %v1925
        %v1944 = vsel %vm535, %v1943, %v1929
        %1945 = vrot.lane.b32.xlu0 %v1255, 126
        %v1946 = vpop.permute.xlu0 %1945
        %1947 = vrot.lane.b32.xlu0 %v1257, 126
        %v1948 = vpop.permute.xlu0 %1947
        %1949 = vrot.lane.b32.xlu0 %v1260, 126
        %v1950 = vpop.permute.xlu0 %1949
        %1951 = vrot.lane.b32.xlu0 %v1262, 126
        %v1952 = vpop.permute.xlu0 %1951
        %1953 = vrot.lane.b32.xlu0 %v1265, 126
        %v1954 = vpop.permute.xlu0 %1953
        %1955 = vrot.lane.b32.xlu0 %v1267, 126
        %v1956 = vpop.permute.xlu0 %1955
        %1957 = vrot.lane.b32.xlu0 %v1270, 126
        %v1958 = vpop.permute.xlu0 %1957
        %1959 = vrot.lane.b32.xlu0 %v1272, 126
        %v1960 = vpop.permute.xlu0 %1959
        %1961 = vrot.lane.b32.xlu0 %v1275, 126
        %v1962 = vpop.permute.xlu0 %1961
        %1963 = vrot.lane.b32.xlu0 %v1277, 126
        %v1964 = vpop.permute.xlu0 %1963
        %1965 = vrot.lane.b32.xlu0 %v1280, 126
        %v1966 = vpop.permute.xlu0 %1965
        %1967 = vrot.lane.b32.xlu0 %v1282, 126
        %v1968 = vpop.permute.xlu0 %1967
        %1969 = vrot.lane.b32.xlu0 %v1285, 126
        %v1970 = vpop.permute.xlu0 %1969
        %1971 = vrot.lane.b32.xlu0 %v1287, 126
        %v1972 = vpop.permute.xlu0 %1971
        %1973 = vrot.lane.b32.xlu0 %v1290, 126
        %v1974 = vpop.permute.xlu0 %1973
        %1975 = vrot.lane.b32.xlu0 %v1292, 126
        %v1976 = vpop.permute.xlu0 %1975
        %v1993 = vrot.slane %v1954, 4
        %v1994 = vsel %vm243, %v1993, %v1946
        %v1995 = vrot.slane %v1946, 4
        %v1996 = vsel %vm243, %v1954, %v1995
        %v1998 = vunpack.c.l.s4 1983009808
        %v1999 = vunpack.c.0.s8 %v1998
        %v2000 = vperm.slane %v1994, %v1999
        %v2002 = vunpack.c.l.s4 1983009808
        %v2003 = vunpack.c.0.s8 %v2002
        %v2004 = vperm.slane %v1996, %v2003
        %v2005 = vrot.slane %v1958, 4
        %v2006 = vsel %vm243, %v2005, %v1950
        %v2007 = vrot.slane %v1950, 4
        %v2008 = vsel %vm243, %v1958, %v2007
        %v2010 = vunpack.c.l.s4 1983009808
        %v2011 = vunpack.c.0.s8 %v2010
        %v2012 = vperm.slane %v2006, %v2011
        %v2014 = vunpack.c.l.s4 1983009808
        %v2015 = vunpack.c.0.s8 %v2014
        %v2016 = vperm.slane %v2008, %v2015
        %v2017 = vrot.slane %v1970, 4
        %v2018 = vsel %vm243, %v2017, %v1962
        %v2019 = vrot.slane %v1962, 4
        %v2020 = vsel %vm243, %v1970, %v2019
        %v2022 = vunpack.c.l.s4 1983009808
        %v2023 = vunpack.c.0.s8 %v2022
        %v2024 = vperm.slane %v2018, %v2023
        %v2026 = vunpack.c.l.s4 1983009808
        %v2027 = vunpack.c.0.s8 %v2026
        %v2028 = vperm.slane %v2020, %v2027
        %v2029 = vrot.slane %v1974, 4
        %v2030 = vsel %vm243, %v2029, %v1966
        %v2031 = vrot.slane %v1966, 4
        %v2032 = vsel %vm243, %v1974, %v2031
        %v2034 = vunpack.c.l.s4 1983009808
        %v2035 = vunpack.c.0.s8 %v2034
        %v2036 = vperm.slane %v2030, %v2035
        %v2038 = vunpack.c.l.s4 1983009808
        %v2039 = vunpack.c.0.s8 %v2038
        %v2040 = vperm.slane %v2032, %v2039
        %v2041 = vrot.slane %v2012, 4
        %v2042 = vsel %vm243, %v2041, %v2000
        %v2043 = vrot.slane %v2000, 4
        %v2044 = vsel %vm243, %v2012, %v2043
        %v2046 = vunpack.c.l.s4 1934713408
        %v2047 = vunpack.c.0.s8 %v2046
        %v2048 = vperm.slane %v2042, %v2047
        %v2050 = vunpack.c.l.s4 1934713408
        %v2051 = vunpack.c.0.s8 %v2050
        %v2052 = vperm.slane %v2044, %v2051
        %v2053 = vrot.slane %v2016, 4
        %v2054 = vsel %vm243, %v2053, %v2004
        %v2055 = vrot.slane %v2004, 4
        %v2056 = vsel %vm243, %v2016, %v2055
        %v2058 = vunpack.c.l.s4 1934713408
        %v2059 = vunpack.c.0.s8 %v2058
        %v2060 = vperm.slane %v2054, %v2059
        %v2062 = vunpack.c.l.s4 1934713408
        %v2063 = vunpack.c.0.s8 %v2062
        %v2064 = vperm.slane %v2056, %v2063
        %v2065 = vrot.slane %v2036, 4
        %v2066 = vsel %vm243, %v2065, %v2024
        %v2067 = vrot.slane %v2024, 4
        %v2068 = vsel %vm243, %v2036, %v2067
        %v2070 = vunpack.c.l.s4 1934713408
        %v2071 = vunpack.c.0.s8 %v2070
        %v2072 = vperm.slane %v2066, %v2071
        %v2074 = vunpack.c.l.s4 1934713408
        %v2075 = vunpack.c.0.s8 %v2074
        %v2076 = vperm.slane %v2068, %v2075
        %v2077 = vrot.slane %v2040, 4
        %v2078 = vsel %vm243, %v2077, %v2028
        %v2079 = vrot.slane %v2028, 4
        %v2080 = vsel %vm243, %v2040, %v2079
        %v2082 = vunpack.c.l.s4 1934713408
        %v2083 = vunpack.c.0.s8 %v2082
        %v2084 = vperm.slane %v2078, %v2083
        %v2086 = vunpack.c.l.s4 1934713408
        %v2087 = vunpack.c.0.s8 %v2086
        %v2088 = vperm.slane %v2080, %v2087
        %v2089 = vrot.slane %v2072, 4
        %v2090 = vsel %vm243, %v2089, %v2048
        %v2091 = vrot.slane %v2048, 4
        %v2092 = vsel %vm243, %v2072, %v2091
        %v2093 = vrot.slane %v2076, 4
        %v2094 = vsel %vm243, %v2093, %v2052
        %v2095 = vrot.slane %v2052, 4
        %v2096 = vsel %vm243, %v2076, %v2095
        %v2097 = vrot.slane %v2084, 4
        %v2098 = vsel %vm243, %v2097, %v2060
        %v2099 = vrot.slane %v2060, 4
        %v2100 = vsel %vm243, %v2084, %v2099
        %v2101 = vrot.slane %v2088, 4
        %v2102 = vsel %vm243, %v2101, %v2064
        %v2103 = vrot.slane %v2064, 4
        %v2104 = vsel %vm243, %v2088, %v2103
        %v2105 = vrot.slane %v1956, 4
        %v2106 = vsel %vm243, %v2105, %v1948
        %v2107 = vrot.slane %v1948, 4
        %v2108 = vsel %vm243, %v1956, %v2107
        %v2110 = vunpack.c.l.s4 1983009808
        %v2111 = vunpack.c.0.s8 %v2110
        %v2112 = vperm.slane %v2106, %v2111
        %v2114 = vunpack.c.l.s4 1983009808
        %v2115 = vunpack.c.0.s8 %v2114
        %v2116 = vperm.slane %v2108, %v2115
        %v2117 = vrot.slane %v1960, 4
        %v2118 = vsel %vm243, %v2117, %v1952
        %v2119 = vrot.slane %v1952, 4
        %v2120 = vsel %vm243, %v1960, %v2119
        %v2122 = vunpack.c.l.s4 1983009808
        %v2123 = vunpack.c.0.s8 %v2122
        %v2124 = vperm.slane %v2118, %v2123
        %v2126 = vunpack.c.l.s4 1983009808
        %v2127 = vunpack.c.0.s8 %v2126
        %v2128 = vperm.slane %v2120, %v2127
        %v2129 = vrot.slane %v1972, 4
        %v2130 = vsel %vm243, %v2129, %v1964
        %v2131 = vrot.slane %v1964, 4
        %v2132 = vsel %vm243, %v1972, %v2131
        %v2134 = vunpack.c.l.s4 1983009808
        %v2135 = vunpack.c.0.s8 %v2134
        %v2136 = vperm.slane %v2130, %v2135
        %v2138 = vunpack.c.l.s4 1983009808
        %v2139 = vunpack.c.0.s8 %v2138
        %v2140 = vperm.slane %v2132, %v2139
        %v2141 = vrot.slane %v1976, 4
        %v2142 = vsel %vm243, %v2141, %v1968
        %v2143 = vrot.slane %v1968, 4
        %v2144 = vsel %vm243, %v1976, %v2143
        %v2146 = vunpack.c.l.s4 1983009808
        %v2147 = vunpack.c.0.s8 %v2146
        %v2148 = vperm.slane %v2142, %v2147
        %v2150 = vunpack.c.l.s4 1983009808
        %v2151 = vunpack.c.0.s8 %v2150
        %v2152 = vperm.slane %v2144, %v2151
        %v2153 = vrot.slane %v2124, 4
        %v2154 = vsel %vm243, %v2153, %v2112
        %v2155 = vrot.slane %v2112, 4
        %v2156 = vsel %vm243, %v2124, %v2155
        %v2158 = vunpack.c.l.s4 1934713408
        %v2159 = vunpack.c.0.s8 %v2158
        %v2160 = vperm.slane %v2154, %v2159
        %v2162 = vunpack.c.l.s4 1934713408
        %v2163 = vunpack.c.0.s8 %v2162
        %v2164 = vperm.slane %v2156, %v2163
        %v2165 = vrot.slane %v2128, 4
        %v2166 = vsel %vm243, %v2165, %v2116
        %v2167 = vrot.slane %v2116, 4
        %v2168 = vsel %vm243, %v2128, %v2167
        %v2170 = vunpack.c.l.s4 1934713408
        %v2171 = vunpack.c.0.s8 %v2170
        %v2172 = vperm.slane %v2166, %v2171
        %v2174 = vunpack.c.l.s4 1934713408
        %v2175 = vunpack.c.0.s8 %v2174
        %v2176 = vperm.slane %v2168, %v2175
        %v2177 = vrot.slane %v2148, 4
        %v2178 = vsel %vm243, %v2177, %v2136
        %v2179 = vrot.slane %v2136, 4
        %v2180 = vsel %vm243, %v2148, %v2179
        %v2182 = vunpack.c.l.s4 1934713408
        %v2183 = vunpack.c.0.s8 %v2182
        %v2184 = vperm.slane %v2178, %v2183
        %v2186 = vunpack.c.l.s4 1934713408
        %v2187 = vunpack.c.0.s8 %v2186
        %v2188 = vperm.slane %v2180, %v2187
        %v2189 = vrot.slane %v2152, 4
        %v2190 = vsel %vm243, %v2189, %v2140
        %v2191 = vrot.slane %v2140, 4
        %v2192 = vsel %vm243, %v2152, %v2191
        %v2194 = vunpack.c.l.s4 1934713408
        %v2195 = vunpack.c.0.s8 %v2194
        %v2196 = vperm.slane %v2190, %v2195
        %v2198 = vunpack.c.l.s4 1934713408
        %v2199 = vunpack.c.0.s8 %v2198
        %v2200 = vperm.slane %v2192, %v2199
        %v2201 = vrot.slane %v2184, 4
        %v2202 = vsel %vm243, %v2201, %v2160
        %v2203 = vrot.slane %v2160, 4
        %v2204 = vsel %vm243, %v2184, %v2203
        %v2205 = vrot.slane %v2188, 4
        %v2206 = vsel %vm243, %v2205, %v2164
        %v2207 = vrot.slane %v2164, 4
        %v2208 = vsel %vm243, %v2188, %v2207
        %v2209 = vrot.slane %v2196, 4
        %v2210 = vsel %vm243, %v2209, %v2172
        %v2211 = vrot.slane %v2172, 4
        %v2212 = vsel %vm243, %v2196, %v2211
        %v2213 = vrot.slane %v2200, 4
        %v2214 = vsel %vm243, %v2213, %v2176
        %v2215 = vrot.slane %v2176, 4
        %v2216 = vsel %vm243, %v2200, %v2215
        %2218 = vrot.lane.b32.xlu0 %v2092, 16
        %v2219 = vpop.permute.xlu0 %2218
        %2222 = vrot.lane.b32.xlu0 %v2094, 32
        %v2223 = vpop.permute.xlu0 %2222
        %2226 = vrot.lane.b32.xlu0 %v2096, 48
        %v2227 = vpop.permute.xlu0 %2226
        %2230 = vrot.lane.b32.xlu0 %v2098, 64
        %v2231 = vpop.permute.xlu0 %2230
        %2234 = vrot.lane.b32.xlu0 %v2100, 80
        %v2235 = vpop.permute.xlu0 %2234
        %2238 = vrot.lane.b32.xlu0 %v2102, 96
        %v2239 = vpop.permute.xlu0 %2238
        %2242 = vrot.lane.b32.xlu0 %v2104, 112
        %v2243 = vpop.permute.xlu0 %2242
        %2246 = vrot.lane.b32.xlu0 %v2204, 16
        %v2247 = vpop.permute.xlu0 %2246
        %2250 = vrot.lane.b32.xlu0 %v2206, 32
        %v2251 = vpop.permute.xlu0 %2250
        %2254 = vrot.lane.b32.xlu0 %v2208, 48
        %v2255 = vpop.permute.xlu0 %2254
        %2258 = vrot.lane.b32.xlu0 %v2210, 64
        %v2259 = vpop.permute.xlu0 %2258
        %2262 = vrot.lane.b32.xlu0 %v2212, 80
        %v2263 = vpop.permute.xlu0 %2262
        %2266 = vrot.lane.b32.xlu0 %v2214, 96
        %v2267 = vpop.permute.xlu0 %2266
        %2270 = vrot.lane.b32.xlu0 %v2216, 112
        %v2271 = vpop.permute.xlu0 %2270
        %v2273 = vsel %vm523, %v2090, %v2219
        %v2274 = vsel %vm525, %v2273, %v2223
        %v2275 = vsel %vm527, %v2274, %v2227
        %v2276 = vsel %vm529, %v2275, %v2231
        %v2277 = vsel %vm531, %v2276, %v2235
        %v2278 = vsel %vm533, %v2277, %v2239
        %v2279 = vsel %vm535, %v2278, %v2243
        %v2280 = vsel %vm523, %v2202, %v2247
        %v2281 = vsel %vm525, %v2280, %v2251
        %v2282 = vsel %vm527, %v2281, %v2255
        %v2283 = vsel %vm529, %v2282, %v2259
        %v2284 = vsel %vm531, %v2283, %v2263
        %v2285 = vsel %vm533, %v2284, %v2267
        %v2286 = vsel %vm535, %v2285, %v2271
        %vm2287 = vcmask 1045504
        %v2288 = vrot.slane %v218, 2
        %v2289 = vrot.slane %v219, 2
        %v2290 = vsel %vm2287, %v2288, %v2289
        %v2291 = vrot.slane %v220, 2
        %v2292 = vsel %vm2287, %v2289, %v2291
        %v2293 = vrot.slane %v221, 2
        %v2294 = vrot.slane %v222, 2
        %v2295 = vsel %vm2287, %v2293, %v2294
        %v2296 = vrot.slane %v223, 2
        %v2297 = vsel %vm2287, %v2294, %v2296
        %v2298 = vrot.slane %v224, 2
        %v2299 = vrot.slane %v225, 2
        %v2300 = vsel %vm2287, %v2298, %v2299
        %v2301 = vrot.slane %v226, 2
        %v2302 = vsel %vm2287, %v2299, %v2301
        %v2303 = vrot.slane %v227, 2
        %v2304 = vrot.slane %v228, 2
        %v2305 = vsel %vm2287, %v2303, %v2304
        %v2306 = vrot.slane %v229, 2
        %v2307 = vsel %vm2287, %v2304, %v2306
        %v2308 = vrot.slane %v230, 2
        %v2309 = vrot.slane %v231, 2
        %v2310 = vsel %vm2287, %v2308, %v2309
        %v2311 = vrot.slane %v232, 2
        %v2312 = vsel %vm2287, %v2309, %v2311
        %v2313 = vrot.slane %v233, 2
        %v2314 = vrot.slane %v234, 2
        %v2315 = vsel %vm2287, %v2313, %v2314
        %v2316 = vrot.slane %v235, 2
        %v2317 = vsel %vm2287, %v2314, %v2316
        %v2318 = vrot.slane %v236, 2
        %v2319 = vrot.slane %v237, 2
        %v2320 = vsel %vm2287, %v2318, %v2319
        %v2321 = vrot.slane %v238, 2
        %v2322 = vsel %vm2287, %v2319, %v2321
        %v2323 = vrot.slane %v239, 2
        %v2324 = vrot.slane %v240, 2
        %v2325 = vsel %vm2287, %v2323, %v2324
        %v2326 = vrot.slane %v241, 2
        %v2327 = vsel %vm2287, %v2324, %v2326
        %v2344 = vrot.slane %v2300, 4
        %v2345 = vsel %vm243, %v2344, %v2290
        %v2346 = vrot.slane %v2290, 4
        %v2347 = vsel %vm243, %v2300, %v2346
        %v2349 = vunpack.c.l.s4 1983009808
        %v2350 = vunpack.c.0.s8 %v2349
        %v2351 = vperm.slane %v2345, %v2350
        %v2353 = vunpack.c.l.s4 1983009808
        %v2354 = vunpack.c.0.s8 %v2353
        %v2355 = vperm.slane %v2347, %v2354
        %v2356 = vrot.slane %v2305, 4
        %v2357 = vsel %vm243, %v2356, %v2295
        %v2358 = vrot.slane %v2295, 4
        %v2359 = vsel %vm243, %v2305, %v2358
        %v2361 = vunpack.c.l.s4 1983009808
        %v2362 = vunpack.c.0.s8 %v2361
        %v2363 = vperm.slane %v2357, %v2362
        %v2365 = vunpack.c.l.s4 1983009808
        %v2366 = vunpack.c.0.s8 %v2365
        %v2367 = vperm.slane %v2359, %v2366
        %v2368 = vrot.slane %v2320, 4
        %v2369 = vsel %vm243, %v2368, %v2310
        %v2370 = vrot.slane %v2310, 4
        %v2371 = vsel %vm243, %v2320, %v2370
        %v2373 = vunpack.c.l.s4 1983009808
        %v2374 = vunpack.c.0.s8 %v2373
        %v2375 = vperm.slane %v2369, %v2374
        %v2377 = vunpack.c.l.s4 1983009808
        %v2378 = vunpack.c.0.s8 %v2377
        %v2379 = vperm.slane %v2371, %v2378
        %v2380 = vrot.slane %v2325, 4
        %v2381 = vsel %vm243, %v2380, %v2315
        %v2382 = vrot.slane %v2315, 4
        %v2383 = vsel %vm243, %v2325, %v2382
        %v2385 = vunpack.c.l.s4 1983009808
        %v2386 = vunpack.c.0.s8 %v2385
        %v2387 = vperm.slane %v2381, %v2386
        %v2389 = vunpack.c.l.s4 1983009808
        %v2390 = vunpack.c.0.s8 %v2389
        %v2391 = vperm.slane %v2383, %v2390
        %v2392 = vrot.slane %v2363, 4
        %v2393 = vsel %vm243, %v2392, %v2351
        %v2394 = vrot.slane %v2351, 4
        %v2395 = vsel %vm243, %v2363, %v2394
        %v2397 = vunpack.c.l.s4 1934713408
        %v2398 = vunpack.c.0.s8 %v2397
        %v2399 = vperm.slane %v2393, %v2398
        %v2401 = vunpack.c.l.s4 1934713408
        %v2402 = vunpack.c.0.s8 %v2401
        %v2403 = vperm.slane %v2395, %v2402
        %v2404 = vrot.slane %v2367, 4
        %v2405 = vsel %vm243, %v2404, %v2355
        %v2406 = vrot.slane %v2355, 4
        %v2407 = vsel %vm243, %v2367, %v2406
        %v2409 = vunpack.c.l.s4 1934713408
        %v2410 = vunpack.c.0.s8 %v2409
        %v2411 = vperm.slane %v2405, %v2410
        %v2413 = vunpack.c.l.s4 1934713408
        %v2414 = vunpack.c.0.s8 %v2413
        %v2415 = vperm.slane %v2407, %v2414
        %v2416 = vrot.slane %v2387, 4
        %v2417 = vsel %vm243, %v2416, %v2375
        %v2418 = vrot.slane %v2375, 4
        %v2419 = vsel %vm243, %v2387, %v2418
        %v2421 = vunpack.c.l.s4 1934713408
        %v2422 = vunpack.c.0.s8 %v2421
        %v2423 = vperm.slane %v2417, %v2422
        %v2425 = vunpack.c.l.s4 1934713408
        %v2426 = vunpack.c.0.s8 %v2425
        %v2427 = vperm.slane %v2419, %v2426
        %v2428 = vrot.slane %v2391, 4
        %v2429 = vsel %vm243, %v2428, %v2379
        %v2430 = vrot.slane %v2379, 4
        %v2431 = vsel %vm243, %v2391, %v2430
        %v2433 = vunpack.c.l.s4 1934713408
        %v2434 = vunpack.c.0.s8 %v2433
        %v2435 = vperm.slane %v2429, %v2434
        %v2437 = vunpack.c.l.s4 1934713408
        %v2438 = vunpack.c.0.s8 %v2437
        %v2439 = vperm.slane %v2431, %v2438
        %v2440 = vrot.slane %v2423, 4
        %v2441 = vsel %vm243, %v2440, %v2399
        %v2442 = vrot.slane %v2399, 4
        %v2443 = vsel %vm243, %v2423, %v2442
        %v2444 = vrot.slane %v2427, 4
        %v2445 = vsel %vm243, %v2444, %v2403
        %v2446 = vrot.slane %v2403, 4
        %v2447 = vsel %vm243, %v2427, %v2446
        %v2448 = vrot.slane %v2435, 4
        %v2449 = vsel %vm243, %v2448, %v2411
        %v2450 = vrot.slane %v2411, 4
        %v2451 = vsel %vm243, %v2435, %v2450
        %v2452 = vrot.slane %v2439, 4
        %v2453 = vsel %vm243, %v2452, %v2415
        %v2454 = vrot.slane %v2415, 4
        %v2455 = vsel %vm243, %v2439, %v2454
        %v2456 = vrot.slane %v2302, 4
        %v2457 = vsel %vm243, %v2456, %v2292
        %v2458 = vrot.slane %v2292, 4
        %v2459 = vsel %vm243, %v2302, %v2458
        %v2461 = vunpack.c.l.s4 1983009808
        %v2462 = vunpack.c.0.s8 %v2461
        %v2463 = vperm.slane %v2457, %v2462
        %v2465 = vunpack.c.l.s4 1983009808
        %v2466 = vunpack.c.0.s8 %v2465
        %v2467 = vperm.slane %v2459, %v2466
        %v2468 = vrot.slane %v2307, 4
        %v2469 = vsel %vm243, %v2468, %v2297
        %v2470 = vrot.slane %v2297, 4
        %v2471 = vsel %vm243, %v2307, %v2470
        %v2473 = vunpack.c.l.s4 1983009808
        %v2474 = vunpack.c.0.s8 %v2473
        %v2475 = vperm.slane %v2469, %v2474
        %v2477 = vunpack.c.l.s4 1983009808
        %v2478 = vunpack.c.0.s8 %v2477
        %v2479 = vperm.slane %v2471, %v2478
        %v2480 = vrot.slane %v2322, 4
        %v2481 = vsel %vm243, %v2480, %v2312
        %v2482 = vrot.slane %v2312, 4
        %v2483 = vsel %vm243, %v2322, %v2482
        %v2485 = vunpack.c.l.s4 1983009808
        %v2486 = vunpack.c.0.s8 %v2485
        %v2487 = vperm.slane %v2481, %v2486
        %v2489 = vunpack.c.l.s4 1983009808
        %v2490 = vunpack.c.0.s8 %v2489
        %v2491 = vperm.slane %v2483, %v2490
        %v2492 = vrot.slane %v2327, 4
        %v2493 = vsel %vm243, %v2492, %v2317
        %v2494 = vrot.slane %v2317, 4
        %v2495 = vsel %vm243, %v2327, %v2494
        %v2497 = vunpack.c.l.s4 1983009808
        %v2498 = vunpack.c.0.s8 %v2497
        %v2499 = vperm.slane %v2493, %v2498
        %v2501 = vunpack.c.l.s4 1983009808
        %v2502 = vunpack.c.0.s8 %v2501
        %v2503 = vperm.slane %v2495, %v2502
        %v2504 = vrot.slane %v2475, 4
        %v2505 = vsel %vm243, %v2504, %v2463
        %v2506 = vrot.slane %v2463, 4
        %v2507 = vsel %vm243, %v2475, %v2506
        %v2509 = vunpack.c.l.s4 1934713408
        %v2510 = vunpack.c.0.s8 %v2509
        %v2511 = vperm.slane %v2505, %v2510
        %v2513 = vunpack.c.l.s4 1934713408
        %v2514 = vunpack.c.0.s8 %v2513
        %v2515 = vperm.slane %v2507, %v2514
        %v2516 = vrot.slane %v2479, 4
        %v2517 = vsel %vm243, %v2516, %v2467
        %v2518 = vrot.slane %v2467, 4
        %v2519 = vsel %vm243, %v2479, %v2518
        %v2521 = vunpack.c.l.s4 1934713408
        %v2522 = vunpack.c.0.s8 %v2521
        %v2523 = vperm.slane %v2517, %v2522
        %v2525 = vunpack.c.l.s4 1934713408
        %v2526 = vunpack.c.0.s8 %v2525
        %v2527 = vperm.slane %v2519, %v2526
        %v2528 = vrot.slane %v2499, 4
        %v2529 = vsel %vm243, %v2528, %v2487
        %v2530 = vrot.slane %v2487, 4
        %v2531 = vsel %vm243, %v2499, %v2530
        %v2533 = vunpack.c.l.s4 1934713408
        %v2534 = vunpack.c.0.s8 %v2533
        %v2535 = vperm.slane %v2529, %v2534
        %v2537 = vunpack.c.l.s4 1934713408
        %v2538 = vunpack.c.0.s8 %v2537
        %v2539 = vperm.slane %v2531, %v2538
        %v2540 = vrot.slane %v2503, 4
        %v2541 = vsel %vm243, %v2540, %v2491
        %v2542 = vrot.slane %v2491, 4
        %v2543 = vsel %vm243, %v2503, %v2542
        %v2545 = vunpack.c.l.s4 1934713408
        %v2546 = vunpack.c.0.s8 %v2545
        %v2547 = vperm.slane %v2541, %v2546
        %v2549 = vunpack.c.l.s4 1934713408
        %v2550 = vunpack.c.0.s8 %v2549
        %v2551 = vperm.slane %v2543, %v2550
        %v2552 = vrot.slane %v2535, 4
        %v2553 = vsel %vm243, %v2552, %v2511
        %v2554 = vrot.slane %v2511, 4
        %v2555 = vsel %vm243, %v2535, %v2554
        %v2556 = vrot.slane %v2539, 4
        %v2557 = vsel %vm243, %v2556, %v2515
        %v2558 = vrot.slane %v2515, 4
        %v2559 = vsel %vm243, %v2539, %v2558
        %v2560 = vrot.slane %v2547, 4
        %v2561 = vsel %vm243, %v2560, %v2523
        %v2562 = vrot.slane %v2523, 4
        %v2563 = vsel %vm243, %v2547, %v2562
        %v2564 = vrot.slane %v2551, 4
        %v2565 = vsel %vm243, %v2564, %v2527
        %v2566 = vrot.slane %v2527, 4
        %v2567 = vsel %vm243, %v2551, %v2566
        %2569 = vrot.lane.b32.xlu0 %v2443, 16
        %v2570 = vpop.permute.xlu0 %2569
        %2573 = vrot.lane.b32.xlu0 %v2445, 32
        %v2574 = vpop.permute.xlu0 %2573
        %2577 = vrot.lane.b32.xlu0 %v2447, 48
        %v2578 = vpop.permute.xlu0 %2577
        %2581 = vrot.lane.b32.xlu0 %v2449, 64
        %v2582 = vpop.permute.xlu0 %2581
        %2585 = vrot.lane.b32.xlu0 %v2451, 80
        %v2586 = vpop.permute.xlu0 %2585
        %2589 = vrot.lane.b32.xlu0 %v2453, 96
        %v2590 = vpop.permute.xlu0 %2589
        %2593 = vrot.lane.b32.xlu0 %v2455, 112
        %v2594 = vpop.permute.xlu0 %2593
        %2597 = vrot.lane.b32.xlu0 %v2555, 16
        %v2598 = vpop.permute.xlu0 %2597
        %2601 = vrot.lane.b32.xlu0 %v2557, 32
        %v2602 = vpop.permute.xlu0 %2601
        %2605 = vrot.lane.b32.xlu0 %v2559, 48
        %v2606 = vpop.permute.xlu0 %2605
        %2609 = vrot.lane.b32.xlu0 %v2561, 64
        %v2610 = vpop.permute.xlu0 %2609
        %2613 = vrot.lane.b32.xlu0 %v2563, 80
        %v2614 = vpop.permute.xlu0 %2613
        %2617 = vrot.lane.b32.xlu0 %v2565, 96
        %v2618 = vpop.permute.xlu0 %2617
        %2621 = vrot.lane.b32.xlu0 %v2567, 112
        %v2622 = vpop.permute.xlu0 %2621
        %v2624 = vsel %vm523, %v2441, %v2570
        %v2625 = vsel %vm525, %v2624, %v2574
        %v2626 = vsel %vm527, %v2625, %v2578
        %v2627 = vsel %vm529, %v2626, %v2582
        %v2628 = vsel %vm531, %v2627, %v2586
        %v2629 = vsel %vm533, %v2628, %v2590
        %v2630 = vsel %vm535, %v2629, %v2594
        %v2631 = vsel %vm523, %v2553, %v2598
        %v2632 = vsel %vm525, %v2631, %v2602
        %v2633 = vsel %vm527, %v2632, %v2606
        %v2634 = vsel %vm529, %v2633, %v2610
        %v2635 = vsel %vm531, %v2634, %v2614
        %v2636 = vsel %vm533, %v2635, %v2618
        %v2637 = vsel %vm535, %v2636, %v2622
        %2638 = vrot.lane.b32.xlu0 %v2290, 127
        %v2639 = vpop.permute.xlu0 %2638
        %2640 = vrot.lane.b32.xlu0 %v2292, 127
        %v2641 = vpop.permute.xlu0 %2640
        %2642 = vrot.lane.b32.xlu0 %v2295, 127
        %v2643 = vpop.permute.xlu0 %2642
        %2644 = vrot.lane.b32.xlu0 %v2297, 127
        %v2645 = vpop.permute.xlu0 %2644
        %2646 = vrot.lane.b32.xlu0 %v2300, 127
        %v2647 = vpop.permute.xlu0 %2646
        %2648 = vrot.lane.b32.xlu0 %v2302, 127
        %v2649 = vpop.permute.xlu0 %2648
        %2650 = vrot.lane.b32.xlu0 %v2305, 127
        %v2651 = vpop.permute.xlu0 %2650
        %2652 = vrot.lane.b32.xlu0 %v2307, 127
        %v2653 = vpop.permute.xlu0 %2652
        %2654 = vrot.lane.b32.xlu0 %v2310, 127
        %v2655 = vpop.permute.xlu0 %2654
        %2656 = vrot.lane.b32.xlu0 %v2312, 127
        %v2657 = vpop.permute.xlu0 %2656
        %2658 = vrot.lane.b32.xlu0 %v2315, 127
        %v2659 = vpop.permute.xlu0 %2658
        %2660 = vrot.lane.b32.xlu0 %v2317, 127
        %v2661 = vpop.permute.xlu0 %2660
        %2662 = vrot.lane.b32.xlu0 %v2320, 127
        %v2663 = vpop.permute.xlu0 %2662
        %2664 = vrot.lane.b32.xlu0 %v2322, 127
        %v2665 = vpop.permute.xlu0 %2664
        %2666 = vrot.lane.b32.xlu0 %v2325, 127
        %v2667 = vpop.permute.xlu0 %2666
        %2668 = vrot.lane.b32.xlu0 %v2327, 127
        %v2669 = vpop.permute.xlu0 %2668
        %v2686 = vrot.slane %v2647, 4
        %v2687 = vsel %vm243, %v2686, %v2639
        %v2688 = vrot.slane %v2639, 4
        %v2689 = vsel %vm243, %v2647, %v2688
        %v2691 = vunpack.c.l.s4 1983009808
        %v2692 = vunpack.c.0.s8 %v2691
        %v2693 = vperm.slane %v2687, %v2692
        %v2695 = vunpack.c.l.s4 1983009808
        %v2696 = vunpack.c.0.s8 %v2695
        %v2697 = vperm.slane %v2689, %v2696
        %v2698 = vrot.slane %v2651, 4
        %v2699 = vsel %vm243, %v2698, %v2643
        %v2700 = vrot.slane %v2643, 4
        %v2701 = vsel %vm243, %v2651, %v2700
        %v2703 = vunpack.c.l.s4 1983009808
        %v2704 = vunpack.c.0.s8 %v2703
        %v2705 = vperm.slane %v2699, %v2704
        %v2707 = vunpack.c.l.s4 1983009808
        %v2708 = vunpack.c.0.s8 %v2707
        %v2709 = vperm.slane %v2701, %v2708
        %v2710 = vrot.slane %v2663, 4
        %v2711 = vsel %vm243, %v2710, %v2655
        %v2712 = vrot.slane %v2655, 4
        %v2713 = vsel %vm243, %v2663, %v2712
        %v2715 = vunpack.c.l.s4 1983009808
        %v2716 = vunpack.c.0.s8 %v2715
        %v2717 = vperm.slane %v2711, %v2716
        %v2719 = vunpack.c.l.s4 1983009808
        %v2720 = vunpack.c.0.s8 %v2719
        %v2721 = vperm.slane %v2713, %v2720
        %v2722 = vrot.slane %v2667, 4
        %v2723 = vsel %vm243, %v2722, %v2659
        %v2724 = vrot.slane %v2659, 4
        %v2725 = vsel %vm243, %v2667, %v2724
        %v2727 = vunpack.c.l.s4 1983009808
        %v2728 = vunpack.c.0.s8 %v2727
        %v2729 = vperm.slane %v2723, %v2728
        %v2731 = vunpack.c.l.s4 1983009808
        %v2732 = vunpack.c.0.s8 %v2731
        %v2733 = vperm.slane %v2725, %v2732
        %v2734 = vrot.slane %v2705, 4
        %v2735 = vsel %vm243, %v2734, %v2693
        %v2736 = vrot.slane %v2693, 4
        %v2737 = vsel %vm243, %v2705, %v2736
        %v2739 = vunpack.c.l.s4 1934713408
        %v2740 = vunpack.c.0.s8 %v2739
        %v2741 = vperm.slane %v2735, %v2740
        %v2743 = vunpack.c.l.s4 1934713408
        %v2744 = vunpack.c.0.s8 %v2743
        %v2745 = vperm.slane %v2737, %v2744
        %v2746 = vrot.slane %v2709, 4
        %v2747 = vsel %vm243, %v2746, %v2697
        %v2748 = vrot.slane %v2697, 4
        %v2749 = vsel %vm243, %v2709, %v2748
        %v2751 = vunpack.c.l.s4 1934713408
        %v2752 = vunpack.c.0.s8 %v2751
        %v2753 = vperm.slane %v2747, %v2752
        %v2755 = vunpack.c.l.s4 1934713408
        %v2756 = vunpack.c.0.s8 %v2755
        %v2757 = vperm.slane %v2749, %v2756
        %v2758 = vrot.slane %v2729, 4
        %v2759 = vsel %vm243, %v2758, %v2717
        %v2760 = vrot.slane %v2717, 4
        %v2761 = vsel %vm243, %v2729, %v2760
        %v2763 = vunpack.c.l.s4 1934713408
        %v2764 = vunpack.c.0.s8 %v2763
        %v2765 = vperm.slane %v2759, %v2764
        %v2767 = vunpack.c.l.s4 1934713408
        %v2768 = vunpack.c.0.s8 %v2767
        %v2769 = vperm.slane %v2761, %v2768
        %v2770 = vrot.slane %v2733, 4
        %v2771 = vsel %vm243, %v2770, %v2721
        %v2772 = vrot.slane %v2721, 4
        %v2773 = vsel %vm243, %v2733, %v2772
        %v2775 = vunpack.c.l.s4 1934713408
        %v2776 = vunpack.c.0.s8 %v2775
        %v2777 = vperm.slane %v2771, %v2776
        %v2779 = vunpack.c.l.s4 1934713408
        %v2780 = vunpack.c.0.s8 %v2779
        %v2781 = vperm.slane %v2773, %v2780
        %v2782 = vrot.slane %v2765, 4
        %v2783 = vsel %vm243, %v2782, %v2741
        %v2784 = vrot.slane %v2741, 4
        %v2785 = vsel %vm243, %v2765, %v2784
        %v2786 = vrot.slane %v2769, 4
        %v2787 = vsel %vm243, %v2786, %v2745
        %v2788 = vrot.slane %v2745, 4
        %v2789 = vsel %vm243, %v2769, %v2788
        %v2790 = vrot.slane %v2777, 4
        %v2791 = vsel %vm243, %v2790, %v2753
        %v2792 = vrot.slane %v2753, 4
        %v2793 = vsel %vm243, %v2777, %v2792
        %v2794 = vrot.slane %v2781, 4
        %v2795 = vsel %vm243, %v2794, %v2757
        %v2796 = vrot.slane %v2757, 4
        %v2797 = vsel %vm243, %v2781, %v2796
        %v2798 = vrot.slane %v2649, 4
        %v2799 = vsel %vm243, %v2798, %v2641
        %v2800 = vrot.slane %v2641, 4
        %v2801 = vsel %vm243, %v2649, %v2800
        %v2803 = vunpack.c.l.s4 1983009808
        %v2804 = vunpack.c.0.s8 %v2803
        %v2805 = vperm.slane %v2799, %v2804
        %v2807 = vunpack.c.l.s4 1983009808
        %v2808 = vunpack.c.0.s8 %v2807
        %v2809 = vperm.slane %v2801, %v2808
        %v2810 = vrot.slane %v2653, 4
        %v2811 = vsel %vm243, %v2810, %v2645
        %v2812 = vrot.slane %v2645, 4
        %v2813 = vsel %vm243, %v2653, %v2812
        %v2815 = vunpack.c.l.s4 1983009808
        %v2816 = vunpack.c.0.s8 %v2815
        %v2817 = vperm.slane %v2811, %v2816
        %v2819 = vunpack.c.l.s4 1983009808
        %v2820 = vunpack.c.0.s8 %v2819
        %v2821 = vperm.slane %v2813, %v2820
        %v2822 = vrot.slane %v2665, 4
        %v2823 = vsel %vm243, %v2822, %v2657
        %v2824 = vrot.slane %v2657, 4
        %v2825 = vsel %vm243, %v2665, %v2824
        %v2827 = vunpack.c.l.s4 1983009808
        %v2828 = vunpack.c.0.s8 %v2827
        %v2829 = vperm.slane %v2823, %v2828
        %v2831 = vunpack.c.l.s4 1983009808
        %v2832 = vunpack.c.0.s8 %v2831
        %v2833 = vperm.slane %v2825, %v2832
        %v2834 = vrot.slane %v2669, 4
        %v2835 = vsel %vm243, %v2834, %v2661
        %v2836 = vrot.slane %v2661, 4
        %v2837 = vsel %vm243, %v2669, %v2836
        %v2839 = vunpack.c.l.s4 1983009808
        %v2840 = vunpack.c.0.s8 %v2839
        %v2841 = vperm.slane %v2835, %v2840
        %v2843 = vunpack.c.l.s4 1983009808
        %v2844 = vunpack.c.0.s8 %v2843
        %v2845 = vperm.slane %v2837, %v2844
        %v2846 = vrot.slane %v2817, 4
        %v2847 = vsel %vm243, %v2846, %v2805
        %v2848 = vrot.slane %v2805, 4
        %v2849 = vsel %vm243, %v2817, %v2848
        %v2851 = vunpack.c.l.s4 1934713408
        %v2852 = vunpack.c.0.s8 %v2851
        %v2853 = vperm.slane %v2847, %v2852
        %v2855 = vunpack.c.l.s4 1934713408
        %v2856 = vunpack.c.0.s8 %v2855
        %v2857 = vperm.slane %v2849, %v2856
        %v2858 = vrot.slane %v2821, 4
        %v2859 = vsel %vm243, %v2858, %v2809
        %v2860 = vrot.slane %v2809, 4
        %v2861 = vsel %vm243, %v2821, %v2860
        %v2863 = vunpack.c.l.s4 1934713408
        %v2864 = vunpack.c.0.s8 %v2863
        %v2865 = vperm.slane %v2859, %v2864
        %v2867 = vunpack.c.l.s4 1934713408
        %v2868 = vunpack.c.0.s8 %v2867
        %v2869 = vperm.slane %v2861, %v2868
        %v2870 = vrot.slane %v2841, 4
        %v2871 = vsel %vm243, %v2870, %v2829
        %v2872 = vrot.slane %v2829, 4
        %v2873 = vsel %vm243, %v2841, %v2872
        %v2875 = vunpack.c.l.s4 1934713408
        %v2876 = vunpack.c.0.s8 %v2875
        %v2877 = vperm.slane %v2871, %v2876
        %v2879 = vunpack.c.l.s4 1934713408
        %v2880 = vunpack.c.0.s8 %v2879
        %v2881 = vperm.slane %v2873, %v2880
        %v2882 = vrot.slane %v2845, 4
        %v2883 = vsel %vm243, %v2882, %v2833
        %v2884 = vrot.slane %v2833, 4
        %v2885 = vsel %vm243, %v2845, %v2884
        %v2887 = vunpack.c.l.s4 1934713408
        %v2888 = vunpack.c.0.s8 %v2887
        %v2889 = vperm.slane %v2883, %v2888
        %v2891 = vunpack.c.l.s4 1934713408
        %v2892 = vunpack.c.0.s8 %v2891
        %v2893 = vperm.slane %v2885, %v2892
        %v2894 = vrot.slane %v2877, 4
        %v2895 = vsel %vm243, %v2894, %v2853
        %v2896 = vrot.slane %v2853, 4
        %v2897 = vsel %vm243, %v2877, %v2896
        %v2898 = vrot.slane %v2881, 4
        %v2899 = vsel %vm243, %v2898, %v2857
        %v2900 = vrot.slane %v2857, 4
        %v2901 = vsel %vm243, %v2881, %v2900
        %v2902 = vrot.slane %v2889, 4
        %v2903 = vsel %vm243, %v2902, %v2865
        %v2904 = vrot.slane %v2865, 4
        %v2905 = vsel %vm243, %v2889, %v2904
        %v2906 = vrot.slane %v2893, 4
        %v2907 = vsel %vm243, %v2906, %v2869
        %v2908 = vrot.slane %v2869, 4
        %v2909 = vsel %vm243, %v2893, %v2908
        %2911 = vrot.lane.b32.xlu0 %v2785, 16
        %v2912 = vpop.permute.xlu0 %2911
        %2915 = vrot.lane.b32.xlu0 %v2787, 32
        %v2916 = vpop.permute.xlu0 %2915
        %2919 = vrot.lane.b32.xlu0 %v2789, 48
        %v2920 = vpop.permute.xlu0 %2919
        %2923 = vrot.lane.b32.xlu0 %v2791, 64
        %v2924 = vpop.permute.xlu0 %2923
        %2927 = vrot.lane.b32.xlu0 %v2793, 80
        %v2928 = vpop.permute.xlu0 %2927
        %2931 = vrot.lane.b32.xlu0 %v2795, 96
        %v2932 = vpop.permute.xlu0 %2931
        %2935 = vrot.lane.b32.xlu0 %v2797, 112
        %v2936 = vpop.permute.xlu0 %2935
        %2939 = vrot.lane.b32.xlu0 %v2897, 16
        %v2940 = vpop.permute.xlu0 %2939
        %2943 = vrot.lane.b32.xlu0 %v2899, 32
        %v2944 = vpop.permute.xlu0 %2943
        %2947 = vrot.lane.b32.xlu0 %v2901, 48
        %v2948 = vpop.permute.xlu0 %2947
        %2951 = vrot.lane.b32.xlu0 %v2903, 64
        %v2952 = vpop.permute.xlu0 %2951
        %2955 = vrot.lane.b32.xlu0 %v2905, 80
        %v2956 = vpop.permute.xlu0 %2955
        %2959 = vrot.lane.b32.xlu0 %v2907, 96
        %v2960 = vpop.permute.xlu0 %2959
        %2963 = vrot.lane.b32.xlu0 %v2909, 112
        %v2964 = vpop.permute.xlu0 %2963
        %v2966 = vsel %vm523, %v2783, %v2912
        %v2967 = vsel %vm525, %v2966, %v2916
        %v2968 = vsel %vm527, %v2967, %v2920
        %v2969 = vsel %vm529, %v2968, %v2924
        %v2970 = vsel %vm531, %v2969, %v2928
        %v2971 = vsel %vm533, %v2970, %v2932
        %v2972 = vsel %vm535, %v2971, %v2936
        %v2973 = vsel %vm523, %v2895, %v2940
        %v2974 = vsel %vm525, %v2973, %v2944
        %v2975 = vsel %vm527, %v2974, %v2948
        %v2976 = vsel %vm529, %v2975, %v2952
        %v2977 = vsel %vm531, %v2976, %v2956
        %v2978 = vsel %vm533, %v2977, %v2960
        %v2979 = vsel %vm535, %v2978, %v2964
        %2980 = vrot.lane.b32.xlu0 %v2290, 126
        %v2981 = vpop.permute.xlu0 %2980
        %2982 = vrot.lane.b32.xlu0 %v2292, 126
        %v2983 = vpop.permute.xlu0 %2982
        %2984 = vrot.lane.b32.xlu0 %v2295, 126
        %v2985 = vpop.permute.xlu0 %2984
        %2986 = vrot.lane.b32.xlu0 %v2297, 126
        %v2987 = vpop.permute.xlu0 %2986
        %2988 = vrot.lane.b32.xlu0 %v2300, 126
        %v2989 = vpop.permute.xlu0 %2988
        %2990 = vrot.lane.b32.xlu0 %v2302, 126
        %v2991 = vpop.permute.xlu0 %2990
        %2992 = vrot.lane.b32.xlu0 %v2305, 126
        %v2993 = vpop.permute.xlu0 %2992
        %2994 = vrot.lane.b32.xlu0 %v2307, 126
        %v2995 = vpop.permute.xlu0 %2994
        %2996 = vrot.lane.b32.xlu0 %v2310, 126
        %v2997 = vpop.permute.xlu0 %2996
        %2998 = vrot.lane.b32.xlu0 %v2312, 126
        %v2999 = vpop.permute.xlu0 %2998
        %3000 = vrot.lane.b32.xlu0 %v2315, 126
        %v3001 = vpop.permute.xlu0 %3000
        %3002 = vrot.lane.b32.xlu0 %v2317, 126
        %v3003 = vpop.permute.xlu0 %3002
        %3004 = vrot.lane.b32.xlu0 %v2320, 126
        %v3005 = vpop.permute.xlu0 %3004
        %3006 = vrot.lane.b32.xlu0 %v2322, 126
        %v3007 = vpop.permute.xlu0 %3006
        %3008 = vrot.lane.b32.xlu0 %v2325, 126
        %v3009 = vpop.permute.xlu0 %3008
        %3010 = vrot.lane.b32.xlu0 %v2327, 126
        %v3011 = vpop.permute.xlu0 %3010
        %v3028 = vrot.slane %v2989, 4
        %v3029 = vsel %vm243, %v3028, %v2981
        %v3030 = vrot.slane %v2981, 4
        %v3031 = vsel %vm243, %v2989, %v3030
        %v3033 = vunpack.c.l.s4 1983009808
        %v3034 = vunpack.c.0.s8 %v3033
        %v3035 = vperm.slane %v3029, %v3034
        %v3037 = vunpack.c.l.s4 1983009808
        %v3038 = vunpack.c.0.s8 %v3037
        %v3039 = vperm.slane %v3031, %v3038
        %v3040 = vrot.slane %v2993, 4
        %v3041 = vsel %vm243, %v3040, %v2985
        %v3042 = vrot.slane %v2985, 4
        %v3043 = vsel %vm243, %v2993, %v3042
        %v3045 = vunpack.c.l.s4 1983009808
        %v3046 = vunpack.c.0.s8 %v3045
        %v3047 = vperm.slane %v3041, %v3046
        %v3049 = vunpack.c.l.s4 1983009808
        %v3050 = vunpack.c.0.s8 %v3049
        %v3051 = vperm.slane %v3043, %v3050
        %v3052 = vrot.slane %v3005, 4
        %v3053 = vsel %vm243, %v3052, %v2997
        %v3054 = vrot.slane %v2997, 4
        %v3055 = vsel %vm243, %v3005, %v3054
        %v3057 = vunpack.c.l.s4 1983009808
        %v3058 = vunpack.c.0.s8 %v3057
        %v3059 = vperm.slane %v3053, %v3058
        %v3061 = vunpack.c.l.s4 1983009808
        %v3062 = vunpack.c.0.s8 %v3061
        %v3063 = vperm.slane %v3055, %v3062
        %v3064 = vrot.slane %v3009, 4
        %v3065 = vsel %vm243, %v3064, %v3001
        %v3066 = vrot.slane %v3001, 4
        %v3067 = vsel %vm243, %v3009, %v3066
        %v3069 = vunpack.c.l.s4 1983009808
        %v3070 = vunpack.c.0.s8 %v3069
        %v3071 = vperm.slane %v3065, %v3070
        %v3073 = vunpack.c.l.s4 1983009808
        %v3074 = vunpack.c.0.s8 %v3073
        %v3075 = vperm.slane %v3067, %v3074
        %v3076 = vrot.slane %v3047, 4
        %v3077 = vsel %vm243, %v3076, %v3035
        %v3078 = vrot.slane %v3035, 4
        %v3079 = vsel %vm243, %v3047, %v3078
        %v3081 = vunpack.c.l.s4 1934713408
        %v3082 = vunpack.c.0.s8 %v3081
        %v3083 = vperm.slane %v3077, %v3082
        %v3085 = vunpack.c.l.s4 1934713408
        %v3086 = vunpack.c.0.s8 %v3085
        %v3087 = vperm.slane %v3079, %v3086
        %v3088 = vrot.slane %v3051, 4
        %v3089 = vsel %vm243, %v3088, %v3039
        %v3090 = vrot.slane %v3039, 4
        %v3091 = vsel %vm243, %v3051, %v3090
        %v3093 = vunpack.c.l.s4 1934713408
        %v3094 = vunpack.c.0.s8 %v3093
        %v3095 = vperm.slane %v3089, %v3094
        %v3097 = vunpack.c.l.s4 1934713408
        %v3098 = vunpack.c.0.s8 %v3097
        %v3099 = vperm.slane %v3091, %v3098
        %v3100 = vrot.slane %v3071, 4
        %v3101 = vsel %vm243, %v3100, %v3059
        %v3102 = vrot.slane %v3059, 4
        %v3103 = vsel %vm243, %v3071, %v3102
        %v3105 = vunpack.c.l.s4 1934713408
        %v3106 = vunpack.c.0.s8 %v3105
        %v3107 = vperm.slane %v3101, %v3106
        %v3109 = vunpack.c.l.s4 1934713408
        %v3110 = vunpack.c.0.s8 %v3109
        %v3111 = vperm.slane %v3103, %v3110
        %v3112 = vrot.slane %v3075, 4
        %v3113 = vsel %vm243, %v3112, %v3063
        %v3114 = vrot.slane %v3063, 4
        %v3115 = vsel %vm243, %v3075, %v3114
        %v3117 = vunpack.c.l.s4 1934713408
        %v3118 = vunpack.c.0.s8 %v3117
        %v3119 = vperm.slane %v3113, %v3118
        %v3121 = vunpack.c.l.s4 1934713408
        %v3122 = vunpack.c.0.s8 %v3121
        %v3123 = vperm.slane %v3115, %v3122
        %v3124 = vrot.slane %v3107, 4
        %v3125 = vsel %vm243, %v3124, %v3083
        %v3126 = vrot.slane %v3083, 4
        %v3127 = vsel %vm243, %v3107, %v3126
        %v3128 = vrot.slane %v3111, 4
        %v3129 = vsel %vm243, %v3128, %v3087
        %v3130 = vrot.slane %v3087, 4
        %v3131 = vsel %vm243, %v3111, %v3130
        %v3132 = vrot.slane %v3119, 4
        %v3133 = vsel %vm243, %v3132, %v3095
        %v3134 = vrot.slane %v3095, 4
        %v3135 = vsel %vm243, %v3119, %v3134
        %v3136 = vrot.slane %v3123, 4
        %v3137 = vsel %vm243, %v3136, %v3099
        %v3138 = vrot.slane %v3099, 4
        %v3139 = vsel %vm243, %v3123, %v3138
        %v3140 = vrot.slane %v2991, 4
        %v3141 = vsel %vm243, %v3140, %v2983
        %v3142 = vrot.slane %v2983, 4
        %v3143 = vsel %vm243, %v2991, %v3142
        %v3145 = vunpack.c.l.s4 1983009808
        %v3146 = vunpack.c.0.s8 %v3145
        %v3147 = vperm.slane %v3141, %v3146
        %v3149 = vunpack.c.l.s4 1983009808
        %v3150 = vunpack.c.0.s8 %v3149
        %v3151 = vperm.slane %v3143, %v3150
        %v3152 = vrot.slane %v2995, 4
        %v3153 = vsel %vm243, %v3152, %v2987
        %v3154 = vrot.slane %v2987, 4
        %v3155 = vsel %vm243, %v2995, %v3154
        %v3157 = vunpack.c.l.s4 1983009808
        %v3158 = vunpack.c.0.s8 %v3157
        %v3159 = vperm.slane %v3153, %v3158
        %v3161 = vunpack.c.l.s4 1983009808
        %v3162 = vunpack.c.0.s8 %v3161
        %v3163 = vperm.slane %v3155, %v3162
        %v3164 = vrot.slane %v3007, 4
        %v3165 = vsel %vm243, %v3164, %v2999
        %v3166 = vrot.slane %v2999, 4
        %v3167 = vsel %vm243, %v3007, %v3166
        %v3169 = vunpack.c.l.s4 1983009808
        %v3170 = vunpack.c.0.s8 %v3169
        %v3171 = vperm.slane %v3165, %v3170
        %v3173 = vunpack.c.l.s4 1983009808
        %v3174 = vunpack.c.0.s8 %v3173
        %v3175 = vperm.slane %v3167, %v3174
        %v3176 = vrot.slane %v3011, 4
        %v3177 = vsel %vm243, %v3176, %v3003
        %v3178 = vrot.slane %v3003, 4
        %v3179 = vsel %vm243, %v3011, %v3178
        %v3181 = vunpack.c.l.s4 1983009808
        %v3182 = vunpack.c.0.s8 %v3181
        %v3183 = vperm.slane %v3177, %v3182
        %v3185 = vunpack.c.l.s4 1983009808
        %v3186 = vunpack.c.0.s8 %v3185
        %v3187 = vperm.slane %v3179, %v3186
        %v3188 = vrot.slane %v3159, 4
        %v3189 = vsel %vm243, %v3188, %v3147
        %v3190 = vrot.slane %v3147, 4
        %v3191 = vsel %vm243, %v3159, %v3190
        %v3193 = vunpack.c.l.s4 1934713408
        %v3194 = vunpack.c.0.s8 %v3193
        %v3195 = vperm.slane %v3189, %v3194
        %v3197 = vunpack.c.l.s4 1934713408
        %v3198 = vunpack.c.0.s8 %v3197
        %v3199 = vperm.slane %v3191, %v3198
        %v3200 = vrot.slane %v3163, 4
        %v3201 = vsel %vm243, %v3200, %v3151
        %v3202 = vrot.slane %v3151, 4
        %v3203 = vsel %vm243, %v3163, %v3202
        %v3205 = vunpack.c.l.s4 1934713408
        %v3206 = vunpack.c.0.s8 %v3205
        %v3207 = vperm.slane %v3201, %v3206
        %v3209 = vunpack.c.l.s4 1934713408
        %v3210 = vunpack.c.0.s8 %v3209
        %v3211 = vperm.slane %v3203, %v3210
        %v3212 = vrot.slane %v3183, 4
        %v3213 = vsel %vm243, %v3212, %v3171
        %v3214 = vrot.slane %v3171, 4
        %v3215 = vsel %vm243, %v3183, %v3214
        %v3217 = vunpack.c.l.s4 1934713408
        %v3218 = vunpack.c.0.s8 %v3217
        %v3219 = vperm.slane %v3213, %v3218
        %v3221 = vunpack.c.l.s4 1934713408
        %v3222 = vunpack.c.0.s8 %v3221
        %v3223 = vperm.slane %v3215, %v3222
        %v3224 = vrot.slane %v3187, 4
        %v3225 = vsel %vm243, %v3224, %v3175
        %v3226 = vrot.slane %v3175, 4
        %v3227 = vsel %vm243, %v3187, %v3226
        %v3229 = vunpack.c.l.s4 1934713408
        %v3230 = vunpack.c.0.s8 %v3229
        %v3231 = vperm.slane %v3225, %v3230
        %v3233 = vunpack.c.l.s4 1934713408
        %v3234 = vunpack.c.0.s8 %v3233
        %v3235 = vperm.slane %v3227, %v3234
        %v3236 = vrot.slane %v3219, 4
        %v3237 = vsel %vm243, %v3236, %v3195
        %v3238 = vrot.slane %v3195, 4
        %v3239 = vsel %vm243, %v3219, %v3238
        %v3240 = vrot.slane %v3223, 4
        %v3241 = vsel %vm243, %v3240, %v3199
        %v3242 = vrot.slane %v3199, 4
        %v3243 = vsel %vm243, %v3223, %v3242
        %v3244 = vrot.slane %v3231, 4
        %v3245 = vsel %vm243, %v3244, %v3207
        %v3246 = vrot.slane %v3207, 4
        %v3247 = vsel %vm243, %v3231, %v3246
        %v3248 = vrot.slane %v3235, 4
        %v3249 = vsel %vm243, %v3248, %v3211
        %v3250 = vrot.slane %v3211, 4
        %v3251 = vsel %vm243, %v3235, %v3250
        %3253 = vrot.lane.b32.xlu0 %v3127, 16
        %v3254 = vpop.permute.xlu0 %3253
        %3257 = vrot.lane.b32.xlu0 %v3129, 32
        %v3258 = vpop.permute.xlu0 %3257
        %3261 = vrot.lane.b32.xlu0 %v3131, 48
        %v3262 = vpop.permute.xlu0 %3261
        %3265 = vrot.lane.b32.xlu0 %v3133, 64
        %v3266 = vpop.permute.xlu0 %3265
        %3269 = vrot.lane.b32.xlu0 %v3135, 80
        %v3270 = vpop.permute.xlu0 %3269
        %3273 = vrot.lane.b32.xlu0 %v3137, 96
        %v3274 = vpop.permute.xlu0 %3273
        %3277 = vrot.lane.b32.xlu0 %v3139, 112
        %v3278 = vpop.permute.xlu0 %3277
        %3281 = vrot.lane.b32.xlu0 %v3239, 16
        %v3282 = vpop.permute.xlu0 %3281
        %3285 = vrot.lane.b32.xlu0 %v3241, 32
        %v3286 = vpop.permute.xlu0 %3285
        %3289 = vrot.lane.b32.xlu0 %v3243, 48
        %v3290 = vpop.permute.xlu0 %3289
        %3293 = vrot.lane.b32.xlu0 %v3245, 64
        %v3294 = vpop.permute.xlu0 %3293
        %3297 = vrot.lane.b32.xlu0 %v3247, 80
        %v3298 = vpop.permute.xlu0 %3297
        %3301 = vrot.lane.b32.xlu0 %v3249, 96
        %v3302 = vpop.permute.xlu0 %3301
        %3305 = vrot.lane.b32.xlu0 %v3251, 112
        %v3306 = vpop.permute.xlu0 %3305
        %v3308 = vsel %vm523, %v3125, %v3254
        %v3309 = vsel %vm525, %v3308, %v3258
        %v3310 = vsel %vm527, %v3309, %v3262
        %v3311 = vsel %vm529, %v3310, %v3266
        %v3312 = vsel %vm531, %v3311, %v3270
        %v3313 = vsel %vm533, %v3312, %v3274
        %v3314 = vsel %vm535, %v3313, %v3278
        %v3315 = vsel %vm523, %v3237, %v3282
        %v3316 = vsel %vm525, %v3315, %v3286
        %v3317 = vsel %vm527, %v3316, %v3290
        %v3318 = vsel %vm529, %v3317, %v3294
        %v3319 = vsel %vm531, %v3318, %v3298
        %v3320 = vsel %vm533, %v3319, %v3302
        %v3321 = vsel %vm535, %v3320, %v3306
        %v3322 = vld [vmem:[%s1] sm:$0xf]
        %v3323 = vpack.c.bf16 %v894, %v536
        %v3324 = vpack.c.bf16 %v901, %v543
        %v3325 = vpack.c.bf16 %v1595, %v1236
        %v3326 = vpack.c.bf16 %v1602, %v1243
        %v3327 = vpack.c.bf16 %v2279, %v1937
        %v3328 = vpack.c.bf16 %v2286, %v1944
        %v3329 = vpack.c.bf16 %v2972, %v2630
        %v3330 = vpack.c.bf16 %v2979, %v2637
        %v3331 = vpack.c.bf16 %v3314, %v3314
        %v3332 = vpack.c.bf16 %v3321, %v3321
        %vm3333 = vcmask 588800
        %v3335 = vsel %vm3333, %v3322, 0
        %vm3337 = vcmask 1043456
        %v3339 = vsel %vm3337, %v3331, 0
        %v3342 = vsel %vm3337, %v3332, 0
        %3344 = vmatpush.bf16.msra.mxu0 0
        %3345 = vmatpush.bf16.msra.mxu0 0
        %3346 = vmatpush.bf16.msra.mxu0 0
        %3347 = vmatpush.bf16.msra.mxu0 %v3339
        %3348 = vmatpush.bf16.msra.mxu0 %v3329
        %3349 = vmatpush.bf16.msra.mxu0 %v3327
        %3350 = vmatpush.bf16.msra.mxu0 %v3325
        %3351 = vmatpush.bf16.msra.mxu0 %v3323
        %3352 = vmatmul.bf16.gmra.mxu0 %v3335
        %v3353 = vpop.f32.mrf.mxu0
        %v3354 = vadd.f32 0.0, %v3353
        %v3355 = vpop.f32.mrf.mxu0
        %3356 = vdwg.mxu0
        %3357 = vmatpush.bf16.msra.mxu0 0
        %3358 = vmatpush.bf16.msra.mxu0 0
        %3359 = vmatpush.bf16.msra.mxu0 0
        %3360 = vmatpush.bf16.msra.mxu0 %v3342
        %3361 = vmatpush.bf16.msra.mxu0 %v3330
        %3362 = vmatpush.bf16.msra.mxu0 %v3328
        %3363 = vmatpush.bf16.msra.mxu0 %v3326
        %3364 = vmatpush.bf16.msra.mxu0 %v3324
        %3365 = vmatmul.bf16.gmra.mxu0 %v3335
        %v3366 = vpop.f32.mrf.mxu0
        %v3367 = vadd.f32 0.0, %v3366
        %v3368 = vpop.f32.mrf.mxu0
        %3369 = vdwg.mxu0
        %3370 = vst [vmem:[%s191] sm:$0xff] %v3354
        %3371 = vst [vmem:[%s191 + $0x8] sm:$0xff] %v3367
        %v3372 = vadd.f32 %v3354, %v3367
        %3373 = vadd.xlane.f32.xlu0 %v3372
        %v3374 = vpop.xlane.xlu0 %3373
        %vm3375 = vcmask 7168
        %3376 = vst.msk [vmem:[%s212] sm:$0xff] %vm3375, %v3374
        %v3377 = vmul.f32 %v3354, %v3354
        %v3378 = vmul.f32 %v3367, %v3367
        %v3379 = vadd.f32 %v3377, %v3378
        %3380 = vadd.xlane.f32.xlu0 %v3379
        %v3381 = vpop.xlane.xlu0 %3380
        %3382 = vst.msk [vmem:[%s216] sm:$0xff] %vm3375, %v3381
        %s3383 = sand.u32 %s74, 1
        %s3384 = scalar_lea.sflag [#allocation3], %s3383
        %s3385 = sand.u32 %s74, 1
        %s3386 = smul.addr %s3385, 16
        %s3387 = scalar_lea.vmem [#allocation2], %s3386
        %p3388 = scmp.lt.s32.totalorder %s19, 1
        %s3389 = scalar_select %p3388, %s19, 1
        %s3390 = smul.addr %s3389, 8
        %s3391 = scalar_lea.vmem %s3, %s3390
        %p3392 = scmp.lt.s32.totalorder %s19, 1
        %s3393 = scalar_select %p3392, %s19, 1
        %s3394 = smul.addr %s3393, 8
        %s3395 = scalar_lea.vmem %s4, %s3394
        // Predicated region
        $region29: #{tpu_custom_call.1} parent=27 // pred_check
          %p3396 = pneg %p84
        $region30: #{tpu_custom_call.1} parent=27 // pred_check_branch
          %3398 = sbr.rel (%p3396) target = $region32
        $region31: #{tpu_custom_call.1} parent=27 // pred_region
          %3400 = vsyncadd %s3384, 0
          %s3401 = smul.addr %s19, 2
          %s3402 = smul.addr %s3401, 8
          %s3403 = scalar_lea.hbm %s2, %s3402
          %s3405 = sshll.u32 %s3387, 4
          %s3406 = int_to_ptr.vmem [resolvable:$true] %s3405
          %s3407 = sshll.u32 %s3403, 4
          %s3408 = int_to_ptr.hbm [resolvable:$true] %s3407
          %3410 = dma.vmem_to_hbm [thread:$0]  %s3406, 256, %s3408, %s3384
        $region32: #{tpu_custom_call.1} parent=27 // pred_fallthru
          _
        // Predicated region
        $region33: #{tpu_custom_call.1} parent=27 // pred_check
          %p3411 = pneg %p110
        $region34: #{tpu_custom_call.1} parent=27 // pred_check_branch
          %3413 = sbr.rel (%p3411) target = $region36
        $region35: #{tpu_custom_call.1} parent=27 // pred_region
          _
        $region36: #{tpu_custom_call.1} parent=27 // pred_fallthru
          _
        // Predicated region
        $region37: #{tpu_custom_call.1} parent=27 // pred_check
          %p3414 = pneg %p136
        $region38: #{tpu_custom_call.1} parent=27 // pred_check_branch
          %3416 = sbr.rel (%p3414) target = $region40
        $region39: #{tpu_custom_call.1} parent=27 // pred_region
          _
        $region40: #{tpu_custom_call.1} parent=27 // pred_fallthru
          _
      $region28: #{tpu_custom_call.1} parent=5 // pred_fallthru
        _
      %p3417 = scmp.le.s32.totalorder 2, %s14
      // Predicated region
      $region41: #{tpu_custom_call.1} parent=5 // pred_check
        %p3418 = pneg %p3417
      $region42: #{tpu_custom_call.1} parent=5 // pred_check_branch
        %3420 = sbr.rel (%p3418) target = $region44
      $region43: #{tpu_custom_call.1} parent=5 // pred_region
        %s3421 = ssub.s32 %s14, 2
        // Predicated region
        $region45: #{tpu_custom_call.1} parent=43 // pred_check
          %p3422 = pneg %p90
        $region46: #{tpu_custom_call.1} parent=43 // pred_check_branch
          %3424 = sbr.rel (%p3422) target = $region48
        $region47: #{tpu_custom_call.1} parent=43 // pred_region
          %s3425 = sand.u32 %s75, 1
          %s3426 = scalar_lea.sflag [#allocation3], %s3425
          %s3427 = sand.u32 %s75, 1
          %s3428 = smul.addr %s3427, 16
          %s3429 = scalar_lea.vmem [#allocation2], %s3428
          %3431 = dma.done %s3426, 256
        $region48: #{tpu_custom_call.1} parent=43 // pred_fallthru
          _
        // Predicated region
        $region49: #{tpu_custom_call.1} parent=43 // pred_check
          %p3432 = pneg %p116
        $region50: #{tpu_custom_call.1} parent=43 // pred_check_branch
          %3434 = sbr.rel (%p3432) target = $region52
        $region51: #{tpu_custom_call.1} parent=43 // pred_region
          %p3435 = scmp.lt.s32.totalorder %s20, 1
          %s3436 = scalar_select %p3435, %s20, 1
          %s3437 = smul.addr %s3436, 8
          %s3438 = scalar_lea.vmem %s3, %s3437
        $region52: #{tpu_custom_call.1} parent=43 // pred_fallthru
          _
        // Predicated region
        $region53: #{tpu_custom_call.1} parent=43 // pred_check
          %p3439 = pneg %p142
        $region54: #{tpu_custom_call.1} parent=43 // pred_check_branch
          %3441 = sbr.rel (%p3439) target = $region56
        $region55: #{tpu_custom_call.1} parent=43 // pred_region
          %p3442 = scmp.lt.s32.totalorder %s20, 1
          %s3443 = scalar_select %p3442, %s20, 1
          %s3444 = smul.addr %s3443, 8
          %s3445 = scalar_lea.vmem %s4, %s3444
        $region56: #{tpu_custom_call.1} parent=43 // pred_fallthru
          _
      $region44: #{tpu_custom_call.1} parent=5 // pred_fallthru
        _
    $region6: #{tpu_custom_call.1} parent=1 // loop_footer
      %s18 = sadd.s32 1, %s14
    $region7: #{tpu_custom_call.1} parent=1 // loop_footer_branch
      %13 = sbr.rel target = $region3
    $region8: #{tpu_custom_call.1} parent=1 // loop_exit
      _
    %3446 = vsyncpa [#allocation3], 1
    %s3447 = scalar_lea.sflag [#allocation3], 1
    %3448 = vsyncpa %s3447, 1

</llo_original>
